<compile_context>
chip_gen: v7x
topology: tpu7x:2x2x1
jax: 0.10.0
libtpu: 0.0.40
codegen_flags: <defaults>
</compile_context>

<pallas_src>
import jax
import jax.numpy as jnp
from jax import lax
from jax.experimental import pallas as pl
from jax.experimental.pallas import tpu as pltpu

EPS = 1e-5  # nn.BatchNorm2d default


def down_block_kernel(x_ref, w1_ref, b1_ref, w2_ref, b2_ref, o_ref,
                      pad1_ref, pad2_ref):
    # x_ref : (Hp, 2, Wp, 2*Cin) free NHWC reshape; [:,0]/[:,1] = even/odd rows,
    #                            last dim = (even col | odd col) x Cin
    # w1_ref: (9*Cin, Cmid)      conv1 weight, BN1 folded, rows ordered (dy,dx,cin)
    # b1_ref: (1, Cmid)          conv1 bias,   BN1 folded
    # w2_ref: (Cout, 9*Cmid)     conv2 weight, BN2 folded (pre-transposed)
    # b2_ref: (Cout, 1)          conv2 bias,   BN2 folded
    # o_ref : (Cout, Hp*Wp)      lane-dense output (free reshape to NCHW outside)
    # pad*_ref: (Hp+2, Wp+2, C)  zero-padded conv inputs (VMEM scratch)
    hp, _, wp, c2 = x_ref.shape
    cin = c2 // 2
    cmid = w1_ref.shape[1]
    m = hp * wp

    # ---- MaxPool2d(kernel_size=2), fully in-kernel --------------------------
    xv = x_ref[...]
    row_max = jnp.maximum(xv[:, 0], xv[:, 1])                       # (Hp, Wp, 2*Cin)
    pooled = jnp.maximum(row_max[:, :, :cin], row_max[:, :, cin:])  # (Hp, Wp, Cin)

    def conv3x3_im2col(pad_ref, src, c):
        """Write `src` into the padded scratch and return the im2col patch
        matrix (Hp*Wp, 9*c) for a 3x3 / padding=1 convolution."""
        # Zero only the 1-pixel border (interior is fully overwritten below).
        zrow = jnp.zeros((1, wp + 2, c), jnp.float32)
        zcol = jnp.zeros((hp + 2, 1, c), jnp.float32)
        pad_ref[pl.ds(0, 1), :, :] = zrow
        pad_ref[pl.ds(hp + 1, 1), :, :] = zrow
        pad_ref[:, pl.ds(0, 1), :] = zcol
        pad_ref[:, pl.ds(wp + 1, 1), :] = zcol
        pad_ref[pl.ds(1, hp), pl.ds(1, wp), :] = src
        taps = [pad_ref[pl.ds(dy, hp), pl.ds(dx, wp), :]            # (Hp, Wp, c)
                for dy in range(3) for dx in range(3)]
        patches = jnp.concatenate(taps, axis=-1)                    # (Hp, Wp, 9*c)
        return patches.reshape(m, 9 * c)

    # ---- conv1 (3x3) + folded BN1 + ReLU: one K=9*Cin MXU matmul ------------
    p1 = conv3x3_im2col(pad1_ref, pooled, cin)                      # (M, 9*Cin)
    y1 = jnp.dot(p1, w1_ref[...], preferred_element_type=jnp.float32)
    y1 = jnp.maximum(y1 + b1_ref[...], 0.0)                         # (M, Cmid)

    # ---- conv2 (3x3) + folded BN2 + ReLU: one K=9*Cmid MXU matmul -----------
    p2 = conv3x3_im2col(pad2_ref, y1.reshape(hp, wp, cmid), cmid)   # (M, 9*Cmid)
    # Contract as W @ patches^T so the result is already (Cout, Hp*Wp):
    # lane-dense stores and a free reshape back to NCHW in the wrapper.
    y2 = lax.dot_general(w2_ref[...], p2,
                         dimension_numbers=(((1,), (1,)), ((), ())),
                         preferred_element_type=jnp.float32)        # (Cout, M)
    y2 = jnp.maximum(y2 + b2_ref[...], 0.0)

    o_ref[...] = y2.astype(o_ref.dtype)


def _fold_conv_bn(w_oihw, b, gamma, beta, mean, var):
    """Fold inference-mode BatchNorm into the conv.  Returns
    (w2d, bias) with w2d[(dy*3+dx)*Cin + cin, cout] matching the kernel im2col."""
    cout, cin, kh, kw = w_oihw.shape
    scale = gamma * lax.rsqrt(var + EPS)                            # (Cout,)
    w2d = jnp.transpose(w_oihw, (2, 3, 1, 0)).reshape(kh * kw * cin, cout)
    return w2d * scale[None, :], (b - mean) * scale + beta


@jax.jit
def down_block_nhwc(x_nhwc, params):
    """DownBlock forward, channels-last input (N, H, W, Cin).
    Returns NCHW (N, Cout, H//2, W//2) via a free reshape of the kernel output."""
    (w1, b1, g1, be1, rm1, rv1, w2, b2, g2, be2, rm2, rv2) = params
    n, h, w, cin = x_nhwc.shape
    hp, wp = h // 2, w // 2
    cmid = w1.shape[0]
    cout = w2.shape[0]

    w1f, b1f = _fold_conv_bn(w1, b1, g1, be1, rm1, rv1)             # (9Cin, Cmid)
    w2f, b2f = _fold_conv_bn(w2, b2, g2, be2, rm2, rv2)             # (9Cmid, Cout)
    w2t = w2f.T                                                     # (Cout, 9Cmid)

    # Free (metadata-only) reshape exposing the 2x2 pool candidates.
    xv = x_nhwc.reshape(n, hp, 2, wp, 2 * cin)

    out = pl.pallas_call(
        down_block_kernel,
        out_shape=jax.ShapeDtypeStruct((n, cout, hp * wp), jnp.float32),
        grid_spec=pltpu.PrefetchScalarGridSpec(
            num_scalar_prefetch=0,
            grid=(n,),
            in_specs=[
                pl.BlockSpec((None, hp, 2, wp, 2 * cin),
                             lambda i: (i, 0, 0, 0, 0)),
                pl.BlockSpec((9 * cin, cmid), lambda i: (0, 0)),
                pl.BlockSpec((1, cmid), lambda i: (0, 0)),
                pl.BlockSpec((cout, 9 * cmid), lambda i: (0, 0)),
                pl.BlockSpec((cout, 1), lambda i: (0, 0)),
            ],
            out_specs=pl.BlockSpec((None, cout, hp * wp), lambda i: (i, 0, 0)),
            scratch_shapes=[
                pltpu.VMEM((hp + 2, wp + 2, cin), jnp.float32),
                pltpu.VMEM((hp + 2, wp + 2, cmid), jnp.float32),
            ],
        ),
        compiler_params=pltpu.CompilerParams(
            dimension_semantics=("parallel",),
            vmem_limit_bytes=64 * 1024 * 1024,
        ),
    )(xv, w1f, b1f.reshape(1, cmid), w2t, b2f.reshape(cout, 1))

    # (N, Cout, Hp*Wp) -> (N, Cout, Hp, Wp): free, already NCHW.
    return out.reshape(n, cout, hp, wp)


@jax.jit
def down_block(x_nchw, params):
    """PyTorch-parity entry point: NCHW in, NCHW out.  The single transpose here
    is the only wrapper-side HBM pass; channels-last pipelines call
    down_block_nhwc directly and skip it.  Assumes even H, W (nn.MaxPool2d(2)
    would drop the trailing row/col for odd sizes)."""
    return down_block_nhwc(jnp.transpose(x_nchw, (0, 2, 3, 1)), params)


def reference(x_nchw, params):
    """Pure-JAX reference with un-folded (inference-mode) BatchNorm."""
    (w1, b1, g1, be1, rm1, rv1, w2, b2, g2, be2, rm2, rv2) = params
    n, cin, h, w = x_nchw.shape
    xp = x_nchw.reshape(n, cin, h // 2, 2, w // 2, 2).max(axis=(3, 5))

    def conv_bn_relu(y, wt, b, g, be, rm, rv):
        y = lax.conv_general_dilated(
            y, wt, window_strides=(1, 1), padding=((1, 1), (1, 1)),
            dimension_numbers=("NCHW", "OIHW", "NCHW"))
        y = y + b[None, :, None, None]
        y = (y - rm[None, :, None, None]) * lax.rsqrt(rv[None, :, None, None] + EPS)
        y = y * g[None, :, None, None] + be[None, :, None, None]
        return jnp.maximum(y, 0.0)

    y = conv_bn_relu(xp, w1, b1, g1, be1, rm1, rv1)
    return conv_bn_relu(y, w2, b2, g2, be2, rm2, rv2)


if __name__ == "__main__":
    key = jax.random.PRNGKey(0)
    ks = jax.random.split(key, 13)

    N, Cin, H, W = 2, 4, 16, 16
    Cout = 8  # ConvBlock: mid_channels defaults to out_channels

    x = jax.random.normal(ks[0], (N, Cin, H, W), dtype=jnp.float32)

    # Conv2d + BatchNorm2d parameters (inference-mode running statistics).
    w1 = jax.random.normal(ks[1], (Cout, Cin, 3, 3), jnp.float32) * 0.2
    b1 = jax.random.normal(ks[2], (Cout,), jnp.float32) * 0.1
    g1 = 1.0 + 0.1 * jax.random.normal(ks[3], (Cout,), jnp.float32)
    be1 = 0.1 * jax.random.normal(ks[4], (Cout,), jnp.float32)
    rm1 = 0.1 * jax.random.normal(ks[5], (Cout,), jnp.float32)
    rv1 = jax.random.uniform(ks[6], (Cout,), jnp.float32, minval=0.5, maxval=1.5)

    w2 = jax.random.normal(ks[7], (Cout, Cout, 3, 3), jnp.float32) * 0.2
    b2 = jax.random.normal(ks[8], (Cout,), jnp.float32) * 0.1
    g2 = 1.0 + 0.1 * jax.random.normal(ks[9], (Cout,), jnp.float32)
    be2 = 0.1 * jax.random.normal(ks[10], (Cout,), jnp.float32)
    rm2 = 0.1 * jax.random.normal(ks[11], (Cout,), jnp.float32)
    rv2 = jax.random.uniform(ks[12], (Cout,), jnp.float32, minval=0.5, maxval=1.5)

    params = (w1, b1, g1, be1, rm1, rv1, w2, b2, g2, be2, rm2, rv2)

    out = jax.block_until_ready(down_block(x, params))
    ref = jax.block_until_ready(reference(x, params))

    assert out.shape == (N, Cout, H // 2, W // 2), out.shape
    max_err = float(jnp.max(jnp.abs(out - ref)))
    assert jnp.allclose(out, ref, atol=2e-4, rtol=2e-4), max_err
    print("KERNEL_OK")
</pallas_src>

<mosaic_0001>
module attributes {stable_mosaic.version = 11 : i64} {
  func.func @down_block_kernel(%arg0: i32, %arg1: memref<1x8x2x8x8xf32, #tpu.memory_space<vmem>>, %arg2: memref<36x8xf32, #tpu.memory_space<vmem>>, %arg3: memref<1x8xf32, #tpu.memory_space<vmem>>, %arg4: memref<8x72xf32, #tpu.memory_space<vmem>>, %arg5: memref<8x1xf32, #tpu.memory_space<vmem>>, %arg6: memref<1x8x64xf32, #tpu.memory_space<vmem>>, %arg7: memref<10x10x4xf32, #tpu.memory_space<vmem>>, %arg8: memref<10x10x8xf32, #tpu.memory_space<vmem>>) attributes {dimension_semantics = [#tpu.dimension_semantics<parallel>], iteration_bounds = array<i64: 2>, scalar_prefetch = 0 : i64, scratch_operands = 2 : i64, tpu.core_type = #tpu.core_type<tc>, window_params = [{transform_indices = @transform_0, window_bounds = array<i64: 1, 8, 2, 8, 8>}, {pipeline_mode = #tpu.pipeline_mode<synchronous>, transform_indices = @transform_1, window_bounds = array<i64: 36, 8>}, {pipeline_mode = #tpu.pipeline_mode<synchronous>, transform_indices = @transform_2, window_bounds = array<i64: 1, 8>}, {pipeline_mode = #tpu.pipeline_mode<synchronous>, transform_indices = @transform_3, window_bounds = array<i64: 8, 72>}, {pipeline_mode = #tpu.pipeline_mode<synchronous>, transform_indices = @transform_4, window_bounds = array<i64: 8, 1>}, {transform_indices = @transform_5, window_bounds = array<i64: 1, 8, 64>}]} {
    %c0 = arith.constant 0 : index
    %c0_0 = arith.constant 0 : index
    %c0_1 = arith.constant 0 : index
    %c0_2 = arith.constant 0 : index
    %c0_3 = arith.constant 0 : index
    %0 = vector.load %arg1[%c0, %c0_0, %c0_1, %c0_2, %c0_3] : memref<1x8x2x8x8xf32, #tpu.memory_space<vmem>>, vector<1x8x2x8x8xf32>
    %1 = vector.shape_cast %0 : vector<1x8x2x8x8xf32> to vector<8x2x8x8xf32>
    %2 = vector.extract_strided_slice %1 {offsets = [0, 0, 0, 0], sizes = [8, 1, 8, 8], strides = [1, 1, 1, 1]} : vector<8x2x8x8xf32> to vector<8x1x8x8xf32>
    %3 = vector.shape_cast %2 : vector<8x1x8x8xf32> to vector<8x8x8xf32>
    %4 = vector.extract_strided_slice %1 {offsets = [0, 1, 0, 0], sizes = [8, 1, 8, 8], strides = [1, 1, 1, 1]} : vector<8x2x8x8xf32> to vector<8x1x8x8xf32>
    %5 = vector.shape_cast %4 : vector<8x1x8x8xf32> to vector<8x8x8xf32>
    %6 = arith.maximumf %3, %5 : vector<8x8x8xf32>
    %7 = vector.extract_strided_slice %6 {offsets = [0, 0, 0], sizes = [8, 8, 4], strides = [1, 1, 1]} : vector<8x8x8xf32> to vector<8x8x4xf32>
    %8 = vector.extract_strided_slice %6 {offsets = [0, 0, 4], sizes = [8, 8, 4], strides = [1, 1, 1]} : vector<8x8x8xf32> to vector<8x8x4xf32>
    %9 = arith.maximumf %7, %8 : vector<8x8x4xf32>
    %cst = arith.constant 0.000000e+00 : f32
    %10 = vector.broadcast %cst : f32 to vector<1x10x4xf32>
    %cst_4 = arith.constant 0.000000e+00 : f32
    %11 = vector.broadcast %cst_4 : f32 to vector<10x1x4xf32>
    %c0_5 = arith.constant 0 : index
    %c0_6 = arith.constant 0 : index
    %c0_7 = arith.constant 0 : index
    %12 = vector.load %arg7[%c0_5, %c0_6, %c0_7] : memref<10x10x4xf32, #tpu.memory_space<vmem>>, vector<1x10x4xf32>
    tpu.vector_store %arg7[%c0_5, %c0_6, %c0_7], %10 {strides = array<i32>} : memref<10x10x4xf32, #tpu.memory_space<vmem>>, vector<1x10x4xf32>,
    %c9 = arith.constant 9 : index
    %c0_8 = arith.constant 0 : index
    %c0_9 = arith.constant 0 : index
    %13 = vector.load %arg7[%c9, %c0_8, %c0_9] : memref<10x10x4xf32, #tpu.memory_space<vmem>>, vector<1x10x4xf32>
    tpu.vector_store %arg7[%c9, %c0_8, %c0_9], %10 {strides = array<i32>} : memref<10x10x4xf32, #tpu.memory_space<vmem>>, vector<1x10x4xf32>,
    %c0_10 = arith.constant 0 : index
    %c0_11 = arith.constant 0 : index
    %c0_12 = arith.constant 0 : index
    %14 = vector.load %arg7[%c0_10, %c0_11, %c0_12] : memref<10x10x4xf32, #tpu.memory_space<vmem>>, vector<10x1x4xf32>
    tpu.vector_store %arg7[%c0_10, %c0_11, %c0_12], %11 {strides = array<i32>} : memref<10x10x4xf32, #tpu.memory_space<vmem>>, vector<10x1x4xf32>,
    %c0_13 = arith.constant 0 : index
    %c9_14 = arith.constant 9 : index
    %c0_15 = arith.constant 0 : index
    %15 = vector.load %arg7[%c0_13, %c9_14, %c0_15] : memref<10x10x4xf32, #tpu.memory_space<vmem>>, vector<10x1x4xf32>
    tpu.vector_store %arg7[%c0_13, %c9_14, %c0_15], %11 {strides = array<i32>} : memref<10x10x4xf32, #tpu.memory_space<vmem>>, vector<10x1x4xf32>,
    %c1 = arith.constant 1 : index
    %c1_16 = arith.constant 1 : index
    %c0_17 = arith.constant 0 : index
    %16 = vector.load %arg7[%c1, %c1_16, %c0_17] : memref<10x10x4xf32, #tpu.memory_space<vmem>>, vector<8x8x4xf32>
    tpu.vector_store %arg7[%c1, %c1_16, %c0_17], %9 {strides = array<i32>} : memref<10x10x4xf32, #tpu.memory_space<vmem>>, vector<8x8x4xf32>,
    %c0_18 = arith.constant 0 : index
    %c0_19 = arith.constant 0 : index
    %c0_20 = arith.constant 0 : index
    %17 = vector.load %arg7[%c0_18, %c0_19, %c0_20] : memref<10x10x4xf32, #tpu.memory_space<vmem>>, vector<8x8x4xf32>
    %c0_21 = arith.constant 0 : index
    %c1_22 = arith.constant 1 : index
    %c0_23 = arith.constant 0 : index
    %18 = vector.load %arg7[%c0_21, %c1_22, %c0_23] : memref<10x10x4xf32, #tpu.memory_space<vmem>>, vector<8x8x4xf32>
    %c0_24 = arith.constant 0 : index
    %c2 = arith.constant 2 : index
    %c0_25 = arith.constant 0 : index
    %19 = vector.load %arg7[%c0_24, %c2, %c0_25] : memref<10x10x4xf32, #tpu.memory_space<vmem>>, vector<8x8x4xf32>
    %c1_26 = arith.constant 1 : index
    %c0_27 = arith.constant 0 : index
    %c0_28 = arith.constant 0 : index
    %20 = vector.load %arg7[%c1_26, %c0_27, %c0_28] : memref<10x10x4xf32, #tpu.memory_space<vmem>>, vector<8x8x4xf32>
    %c1_29 = arith.constant 1 : index
    %c1_30 = arith.constant 1 : index
    %c0_31 = arith.constant 0 : index
    %21 = vector.load %arg7[%c1_29, %c1_30, %c0_31] : memref<10x10x4xf32, #tpu.memory_space<vmem>>, vector<8x8x4xf32>
    %c1_32 = arith.constant 1 : index
    %c2_33 = arith.constant 2 : index
    %c0_34 = arith.constant 0 : index
    %22 = vector.load %arg7[%c1_32, %c2_33, %c0_34] : memref<10x10x4xf32, #tpu.memory_space<vmem>>, vector<8x8x4xf32>
    %c2_35 = arith.constant 2 : index
    %c0_36 = arith.constant 0 : index
    %c0_37 = arith.constant 0 : index
    %23 = vector.load %arg7[%c2_35, %c0_36, %c0_37] : memref<10x10x4xf32, #tpu.memory_space<vmem>>, vector<8x8x4xf32>
    %c2_38 = arith.constant 2 : index
    %c1_39 = arith.constant 1 : index
    %c0_40 = arith.constant 0 : index
    %24 = vector.load %arg7[%c2_38, %c1_39, %c0_40] : memref<10x10x4xf32, #tpu.memory_space<vmem>>, vector<8x8x4xf32>
    %c2_41 = arith.constant 2 : index
    %c2_42 = arith.constant 2 : index
    %c0_43 = arith.constant 0 : index
    %25 = vector.load %arg7[%c2_41, %c2_42, %c0_43] : memref<10x10x4xf32, #tpu.memory_space<vmem>>, vector<8x8x4xf32>
    %26 = tpu.concatenate %17, %18, %19, %20, %21, %22, %23, %24, %25 in 2 : vector<8x8x4xf32>, vector<8x8x4xf32>, vector<8x8x4xf32>, vector<8x8x4xf32>, vector<8x8x4xf32>, vector<8x8x4xf32>, vector<8x8x4xf32>, vector<8x8x4xf32>, vector<8x8x4xf32> -> vector<8x8x36xf32>
    %27 = vector.shape_cast %26 : vector<8x8x36xf32> to vector<64x36xf32>
    %c0_44 = arith.constant 0 : index
    %c0_45 = arith.constant 0 : index
    %28 = vector.load %arg2[%c0_44, %c0_45] : memref<36x8xf32, #tpu.memory_space<vmem>>, vector<36x8xf32>
    %cst_46 = arith.constant dense<0.000000e+00> : vector<64x8xf32>
    %29 = tpu.matmul %27, %28, %cst_46 {dimension_numbers = #tpu.dot_dimension_numbers<[1], [0], [0], [1], [0, 0, 1, 1], [], []>} : vector<64x36xf32>, vector<36x8xf32>, vector<64x8xf32> -> vector<64x8xf32>
    %c0_47 = arith.constant 0 : index
    %c0_48 = arith.constant 0 : index
    %30 = vector.load %arg3[%c0_47, %c0_48] : memref<1x8xf32, #tpu.memory_space<vmem>>, vector<1x8xf32>
    %31 = vector.broadcast %30 : vector<1x8xf32> to vector<64x8xf32>
    %32 = arith.addf %29, %31 : vector<64x8xf32>
    %cst_49 = arith.constant 0.000000e+00 : f32
    %33 = vector.broadcast %cst_49 : f32 to vector<64x8xf32>
    %34 = arith.maximumf %32, %33 : vector<64x8xf32>
    %35 = vector.shape_cast %34 : vector<64x8xf32> to vector<8x8x8xf32>
    %cst_50 = arith.constant 0.000000e+00 : f32
    %36 = vector.broadcast %cst_50 : f32 to vector<1x10x8xf32>
    %cst_51 = arith.constant 0.000000e+00 : f32
    %37 = vector.broadcast %cst_51 : f32 to vector<10x1x8xf32>
    %c0_52 = arith.constant 0 : index
    %c0_53 = arith.constant 0 : index
    %c0_54 = arith.constant 0 : index
    %38 = vector.load %arg8[%c0_52, %c0_53, %c0_54] : memref<10x10x8xf32, #tpu.memory_space<vmem>>, vector<1x10x8xf32>
    tpu.vector_store %arg8[%c0_52, %c0_53, %c0_54], %36 {strides = array<i32>} : memref<10x10x8xf32, #tpu.memory_space<vmem>>, vector<1x10x8xf32>,
    %c9_55 = arith.constant 9 : index
    %c0_56 = arith.constant 0 : index
    %c0_57 = arith.constant 0 : index
    %39 = vector.load %arg8[%c9_55, %c0_56, %c0_57] : memref<10x10x8xf32, #tpu.memory_space<vmem>>, vector<1x10x8xf32>
    tpu.vector_store %arg8[%c9_55, %c0_56, %c0_57], %36 {strides = array<i32>} : memref<10x10x8xf32, #tpu.memory_space<vmem>>, vector<1x10x8xf32>,
    %c0_58 = arith.constant 0 : index
    %c0_59 = arith.constant 0 : index
    %c0_60 = arith.constant 0 : index
    %40 = vector.load %arg8[%c0_58, %c0_59, %c0_60] : memref<10x10x8xf32, #tpu.memory_space<vmem>>, vector<10x1x8xf32>
    tpu.vector_store %arg8[%c0_58, %c0_59, %c0_60], %37 {strides = array<i32>} : memref<10x10x8xf32, #tpu.memory_space<vmem>>, vector<10x1x8xf32>,
    %c0_61 = arith.constant 0 : index
    %c9_62 = arith.constant 9 : index
    %c0_63 = arith.constant 0 : index
    %41 = vector.load %arg8[%c0_61, %c9_62, %c0_63] : memref<10x10x8xf32, #tpu.memory_space<vmem>>, vector<10x1x8xf32>
    tpu.vector_store %arg8[%c0_61, %c9_62, %c0_63], %37 {strides = array<i32>} : memref<10x10x8xf32, #tpu.memory_space<vmem>>, vector<10x1x8xf32>,
    %c1_64 = arith.constant 1 : index
    %c1_65 = arith.constant 1 : index
    %c0_66 = arith.constant 0 : index
    %42 = vector.load %arg8[%c1_64, %c1_65, %c0_66] : memref<10x10x8xf32, #tpu.memory_space<vmem>>, vector<8x8x8xf32>
    tpu.vector_store %arg8[%c1_64, %c1_65, %c0_66], %35 {strides = array<i32>} : memref<10x10x8xf32, #tpu.memory_space<vmem>>, vector<8x8x8xf32>,
    %c0_67 = arith.constant 0 : index
    %c0_68 = arith.constant 0 : index
    %c0_69 = arith.constant 0 : index
    %43 = vector.load %arg8[%c0_67, %c0_68, %c0_69] : memref<10x10x8xf32, #tpu.memory_space<vmem>>, vector<8x8x8xf32>
    %c0_70 = arith.constant 0 : index
    %c1_71 = arith.constant 1 : index
    %c0_72 = arith.constant 0 : index
    %44 = vector.load %arg8[%c0_70, %c1_71, %c0_72] : memref<10x10x8xf32, #tpu.memory_space<vmem>>, vector<8x8x8xf32>
    %c0_73 = arith.constant 0 : index
    %c2_74 = arith.constant 2 : index
    %c0_75 = arith.constant 0 : index
    %45 = vector.load %arg8[%c0_73, %c2_74, %c0_75] : memref<10x10x8xf32, #tpu.memory_space<vmem>>, vector<8x8x8xf32>
    %c1_76 = arith.constant 1 : index
    %c0_77 = arith.constant 0 : index
    %c0_78 = arith.constant 0 : index
    %46 = vector.load %arg8[%c1_76, %c0_77, %c0_78] : memref<10x10x8xf32, #tpu.memory_space<vmem>>, vector<8x8x8xf32>
    %c1_79 = arith.constant 1 : index
    %c1_80 = arith.constant 1 : index
    %c0_81 = arith.constant 0 : index
    %47 = vector.load %arg8[%c1_79, %c1_80, %c0_81] : memref<10x10x8xf32, #tpu.memory_space<vmem>>, vector<8x8x8xf32>
    %c1_82 = arith.constant 1 : index
    %c2_83 = arith.constant 2 : index
    %c0_84 = arith.constant 0 : index
    %48 = vector.load %arg8[%c1_82, %c2_83, %c0_84] : memref<10x10x8xf32, #tpu.memory_space<vmem>>, vector<8x8x8xf32>
    %c2_85 = arith.constant 2 : index
    %c0_86 = arith.constant 0 : index
    %c0_87 = arith.constant 0 : index
    %49 = vector.load %arg8[%c2_85, %c0_86, %c0_87] : memref<10x10x8xf32, #tpu.memory_space<vmem>>, vector<8x8x8xf32>
    %c2_88 = arith.constant 2 : index
    %c1_89 = arith.constant 1 : index
    %c0_90 = arith.constant 0 : index
    %50 = vector.load %arg8[%c2_88, %c1_89, %c0_90] : memref<10x10x8xf32, #tpu.memory_space<vmem>>, vector<8x8x8xf32>
    %c2_91 = arith.constant 2 : index
    %c2_92 = arith.constant 2 : index
    %c0_93 = arith.constant 0 : index
    %51 = vector.load %arg8[%c2_91, %c2_92, %c0_93] : memref<10x10x8xf32, #tpu.memory_space<vmem>>, vector<8x8x8xf32>
    %52 = tpu.concatenate %43, %44, %45, %46, %47, %48, %49, %50, %51 in 2 : vector<8x8x8xf32>, vector<8x8x8xf32>, vector<8x8x8xf32>, vector<8x8x8xf32>, vector<8x8x8xf32>, vector<8x8x8xf32>, vector<8x8x8xf32>, vector<8x8x8xf32>, vector<8x8x8xf32> -> vector<8x8x72xf32>
    %53 = vector.shape_cast %52 : vector<8x8x72xf32> to vector<64x72xf32>
    %c0_94 = arith.constant 0 : index
    %c0_95 = arith.constant 0 : index
    %54 = vector.load %arg4[%c0_94, %c0_95] : memref<8x72xf32, #tpu.memory_space<vmem>>, vector<8x72xf32>
    %cst_96 = arith.constant dense<0.000000e+00> : vector<8x64xf32>
    %55 = tpu.matmul %54, %53, %cst_96 {dimension_numbers = #tpu.dot_dimension_numbers<[1], [1], [0], [0], [0, 0, 1, 0], [], []>} : vector<8x72xf32>, vector<64x72xf32>, vector<8x64xf32> -> vector<8x64xf32>
    %c0_97 = arith.constant 0 : index
    %c0_98 = arith.constant 0 : index
    %56 = vector.load %arg5[%c0_97, %c0_98] : memref<8x1xf32, #tpu.memory_space<vmem>>, vector<8x1xf32>
    %57 = vector.broadcast %56 : vector<8x1xf32> to vector<8x64xf32>
    %58 = arith.addf %55, %57 : vector<8x64xf32>
    %cst_99 = arith.constant 0.000000e+00 : f32
    %59 = vector.broadcast %cst_99 : f32 to vector<8x64xf32>
    %60 = arith.maximumf %58, %59 : vector<8x64xf32>
    %c0_100 = arith.constant 0 : index
    %c0_101 = arith.constant 0 : index
    %c0_102 = arith.constant 0 : index
    %61 = vector.load %arg6[%c0_100, %c0_101, %c0_102] : memref<1x8x64xf32, #tpu.memory_space<vmem>>, vector<1x8x64xf32>
    %62 = vector.shape_cast %61 : vector<1x8x64xf32> to vector<8x64xf32>
    %63 = vector.shape_cast %60 : vector<8x64xf32> to vector<1x8x64xf32>
    tpu.vector_store %arg6[%c0_100, %c0_101, %c0_102], %63 {strides = array<i32>} : memref<1x8x64xf32, #tpu.memory_space<vmem>>, vector<1x8x64xf32>,
    return
  }
  func.func @transform_0(%arg0: i32) -> (i32, i32, i32, i32, i32) {
    %c0_i32 = arith.constant 0 : i32
    %c0_i32_0 = arith.constant 0 : i32
    %c0_i32_1 = arith.constant 0 : i32
    %c0_i32_2 = arith.constant 0 : i32
    %c0_i32_3 = arith.constant 0 : i32
    return %arg0, %c0_i32, %c0_i32_0, %c0_i32_1, %c0_i32_2 : i32, i32, i32, i32, i32
  }
  func.func @transform_1(%arg0: i32) -> (i32, i32) {
    %c0_i32 = arith.constant 0 : i32
    %c0_i32_0 = arith.constant 0 : i32
    %c0_i32_1 = arith.constant 0 : i32
    return %c0_i32, %c0_i32_0 : i32, i32
  }
  func.func @transform_2(%arg0: i32) -> (i32, i32) {
    %c0_i32 = arith.constant 0 : i32
    %c0_i32_0 = arith.constant 0 : i32
    %c0_i32_1 = arith.constant 0 : i32
    return %c0_i32, %c0_i32_0 : i32, i32
  }
  func.func @transform_3(%arg0: i32) -> (i32, i32) {
    %c0_i32 = arith.constant 0 : i32
    %c0_i32_0 = arith.constant 0 : i32
    %c0_i32_1 = arith.constant 0 : i32
    return %c0_i32, %c0_i32_0 : i32, i32
  }
  func.func @transform_4(%arg0: i32) -> (i32, i32) {
    %c0_i32 = arith.constant 0 : i32
    %c0_i32_0 = arith.constant 0 : i32
    %c0_i32_1 = arith.constant 0 : i32
    return %c0_i32, %c0_i32_0 : i32, i32
  }
  func.func @transform_5(%arg0: i32) -> (i32, i32, i32) {
    %c0_i32 = arith.constant 0 : i32
    %c0_i32_0 = arith.constant 0 : i32
    %c0_i32_1 = arith.constant 0 : i32
    return %arg0, %c0_i32, %c0_i32_0 : i32, i32, i32
  }
}

</mosaic_0001>

<llo_original>
// kernel: down_block_nhwc.1
$region0: #{down_block_nhwc.1}
  #allocation0 [shape = 'u32[]', space=smem, size = 0x4, offset = 0x4, fixed_abs, tag = 'smem constant byte address 0x4 - core index']
  #allocation1 [shape = 'u32[144,128]{1,0:T(1,128)}', space=vmem, size = 0x12000, scoped, tag = 'internal scratch']
  #allocation2 [shape = 'f32[10,10,4]{2,1,0:T(8,128)}', space=vmem, size = 0x14000, scoped, tag = 'scratch operand']
  #allocation3 [shape = 'f32[10,10,8]{2,1,0:T(8,128)}', space=vmem, size = 0x14000, scoped, tag = 'scratch operand']
  %s0 = inlined_call_operand.hbm [shape: f32[2,8,2,8,8], index: 0, kind: input, shape index: {}]
  %s1 = inlined_call_operand.hbm [shape: f32[36,8], index: 1, kind: input, shape index: {}]
  %s2 = inlined_call_operand.hbm [shape: f32[1,8], index: 2, kind: input, shape index: {}]
  %s3 = inlined_call_operand.hbm [shape: f32[8,72], index: 3, kind: input, shape index: {}]
  %s4 = inlined_call_operand.hbm [shape: f32[8,1], index: 4, kind: input, shape index: {}]
  %s5 = inlined_call_operand.hbm [shape: f32[2,8,64], index: 5, kind: output, shape index: {}]
  %s6 = sld [smem:[#allocation0]]
  $region73: #{down_block_nhwc.1} parent=0
    _
  %s8 = ssub.s32 1, %s6
  %s9 = scalar_select 0, %s8, %s6
  $region1: #{down_block_nhwc.1} parent=0
    #allocation4 [shape = 'u8[131072]{0}', space=vmem, size = 0x20000, scoped, tag = 'input window, operand 0']
    #allocation5 [shape = 's32[2]{0}', space=sflag, size = 0x8, scoped, tag = 'scoped memory for down_block_nhwc.1']
    #allocation6 [shape = 's32[2]{0}', space=sflag, size = 0x8, scoped, tag = 'scoped memory for down_block_nhwc.1']
    #allocation7 [shape = 'u8[20480]{0}', space=vmem, size = 0x5000, scoped, tag = 'input window, operand 1, single buffered']
    #allocation8 [shape = 's32[1]{0}', space=sflag, size = 0x4, scoped, tag = 'scoped memory for down_block_nhwc.1']
    #allocation9 [shape = 'u8[512]{0}', space=vmem, size = 0x400, scoped, tag = 'input window, operand 2, single buffered']
    #allocation10 [shape = 'u8[4096]{0}', space=vmem, size = 0x1000, scoped, tag = 'input window, operand 3, single buffered']
    #allocation11 [shape = 's32[1]{0}', space=sflag, size = 0x4, scoped, tag = 'scoped memory for down_block_nhwc.1']
    #allocation12 [shape = 'u8[4096]{0}', space=vmem, size = 0x1000, scoped, tag = 'input window, operand 4, single buffered']
    #allocation13 [shape = 'u8[8192]{0}', space=vmem, size = 0x2000, scoped, tag = 'output window, operand 0']
    %10 = vsyncpa [#allocation5], 0
    %s11 = scalar_lea.sflag [#allocation5], 1
    %12 = vsyncpa %s11, 0
    %13 = vsyncpa [#allocation8], 0
    %14 = vsyncpa [#allocation11], 0
    %15 = vsyncpa [#allocation6], 0
    %s16 = scalar_lea.sflag [#allocation6], 1
    %17 = vsyncpa %s16, 0
    loop: start=0, step=1, limit=4
    $region2: #{down_block_nhwc.1} parent=1 // loop_pre_header
      _
    $region3: #{down_block_nhwc.1} parent=1 // loop_header
      %s19 = sphi 0, %s23
      %p20 = scmp.ge.s32.totalorder %s19, 4
      %s29 = sphi 0, %s31
      %s32 = sphi 0, %s29
      %s33 = sphi 0, %s32
      %s49 = sphi 0, %s33
      %s53 = sphi 0, %s53
      %s55 = sphi 0, %s53
      %s56 = sphi 0, %s55
      %s70 = sphi 0, %s56
      %s74 = sphi 0, %s74
      %s76 = sphi 0, %s74
      %s77 = sphi 0, %s76
      %s91 = sphi 0, %s77
      %s95 = sphi 0, %s95
      %s97 = sphi 0, %s95
      %s98 = sphi 0, %s97
      %s112 = sphi 0, %s98
      %s116 = sphi 0, %s116
      %s118 = sphi 0, %s116
      %s119 = sphi 0, %s118
      %s133 = sphi 0, %s119
      %s139 = sphi 0, %s141
      %s142 = sphi 0, %s139
      %s143 = sphi 0, %s142
      %s159 = sphi 0, %s143
    $region4: #{down_block_nhwc.1} parent=1 // loop_header_branch
      %22 = sbr.rel (%p20) target = $region8
    $region5: #{down_block_nhwc.1} parent=1 // loop_body
      %s24 = ssub.s32 %s19, 1
      %s25 = ssub.s32 %s19, 2
      %s26 = sadd.s32 %s19, 1
      %s27 = ssub.s32 %s19, %s26
      %p28 = scmp.eq.s32.totalorder %s27, 0
      %s30 = sadd.s32 %s29, 1
      %s31 = scalar_select %p28, %s29, %s30
      %p34 = pneg %p28
      %p35 = scmp.eq.s32.totalorder %s19, 1
      %p36 = por %p34, %p35
      %p37 = scmp.ne.s32.totalorder %s29, %s32
      %p38 = scmp.eq.s32.totalorder %s19, 0
      %p39 = por %p37, %p38
      %p40 = scmp.ne.s32.totalorder %s29, %s32
      %p41 = scmp.eq.s32.totalorder %s24, 1
      %p42 = por %p40, %p41
      %p43 = scmp.ne.s32.totalorder %s32, %s33
      %p44 = scmp.eq.s32.totalorder %s24, 0
      %p45 = por %p43, %p44
      %p46 = scmp.ne.s32.totalorder %s32, %s33
      %p47 = scmp.eq.s32.totalorder %s25, 1
      %p48 = por %p46, %p47
      %p50 = scmp.ne.s32.totalorder %s33, %s49
      %p51 = scmp.eq.s32.totalorder %s25, 0
      %p52 = por %p50, %p51
      %s54 = sadd.s32 %s53, 1
      %p57 = scmp.eq.s32.totalorder %s19, 1
      %p58 = scmp.ne.s32.totalorder %s53, %s55
      %p59 = scmp.eq.s32.totalorder %s19, 0
      %p60 = por %p58, %p59
      %p61 = scmp.ne.s32.totalorder %s53, %s55
      %p62 = scmp.eq.s32.totalorder %s24, 1
      %p63 = por %p61, %p62
      %p64 = scmp.ne.s32.totalorder %s55, %s56
      %p65 = scmp.eq.s32.totalorder %s24, 0
      %p66 = por %p64, %p65
      %p67 = scmp.ne.s32.totalorder %s55, %s56
      %p68 = scmp.eq.s32.totalorder %s25, 1
      %p69 = por %p67, %p68
      %p71 = scmp.ne.s32.totalorder %s56, %s70
      %p72 = scmp.eq.s32.totalorder %s25, 0
      %p73 = por %p71, %p72
      %s75 = sadd.s32 %s74, 1
      %p78 = scmp.eq.s32.totalorder %s19, 1
      %p79 = scmp.ne.s32.totalorder %s74, %s76
      %p80 = scmp.eq.s32.totalorder %s19, 0
      %p81 = por %p79, %p80
      %p82 = scmp.ne.s32.totalorder %s74, %s76
      %p83 = scmp.eq.s32.totalorder %s24, 1
      %p84 = por %p82, %p83
      %p85 = scmp.ne.s32.totalorder %s76, %s77
      %p86 = scmp.eq.s32.totalorder %s24, 0
      %p87 = por %p85, %p86
      %p88 = scmp.ne.s32.totalorder %s76, %s77
      %p89 = scmp.eq.s32.totalorder %s25, 1
      %p90 = por %p88, %p89
      %p92 = scmp.ne.s32.totalorder %s77, %s91
      %p93 = scmp.eq.s32.totalorder %s25, 0
      %p94 = por %p92, %p93
      %s96 = sadd.s32 %s95, 1
      %p99 = scmp.eq.s32.totalorder %s19, 1
      %p100 = scmp.ne.s32.totalorder %s95, %s97
      %p101 = scmp.eq.s32.totalorder %s19, 0
      %p102 = por %p100, %p101
      %p103 = scmp.ne.s32.totalorder %s95, %s97
      %p104 = scmp.eq.s32.totalorder %s24, 1
      %p105 = por %p103, %p104
      %p106 = scmp.ne.s32.totalorder %s97, %s98
      %p107 = scmp.eq.s32.totalorder %s24, 0
      %p108 = por %p106, %p107
      %p109 = scmp.ne.s32.totalorder %s97, %s98
      %p110 = scmp.eq.s32.totalorder %s25, 1
      %p111 = por %p109, %p110
      %p113 = scmp.ne.s32.totalorder %s98, %s112
      %p114 = scmp.eq.s32.totalorder %s25, 0
      %p115 = por %p113, %p114
      %s117 = sadd.s32 %s116, 1
      %p120 = scmp.eq.s32.totalorder %s19, 1
      %p121 = scmp.ne.s32.totalorder %s116, %s118
      %p122 = scmp.eq.s32.totalorder %s19, 0
      %p123 = por %p121, %p122
      %p124 = scmp.ne.s32.totalorder %s116, %s118
      %p125 = scmp.eq.s32.totalorder %s24, 1
      %p126 = por %p124, %p125
      %p127 = scmp.ne.s32.totalorder %s118, %s119
      %p128 = scmp.eq.s32.totalorder %s24, 0
      %p129 = por %p127, %p128
      %p130 = scmp.ne.s32.totalorder %s118, %s119
      %p131 = scmp.eq.s32.totalorder %s25, 1
      %p132 = por %p130, %p131
      %p134 = scmp.ne.s32.totalorder %s119, %s133
      %p135 = scmp.eq.s32.totalorder %s25, 0
      %p136 = por %p134, %p135
      %s137 = ssub.s32 %s19, %s26
      %p138 = scmp.eq.s32.totalorder %s137, 0
      %s140 = sadd.s32 %s139, 1
      %s141 = scalar_select %p138, %s139, %s140
      %p144 = pneg %p138
      %p145 = scmp.eq.s32.totalorder %s19, 1
      %p146 = por %p144, %p145
      %p147 = scmp.ne.s32.totalorder %s139, %s142
      %p148 = scmp.eq.s32.totalorder %s19, 0
      %p149 = por %p147, %p148
      %p150 = scmp.ne.s32.totalorder %s139, %s142
      %p151 = scmp.eq.s32.totalorder %s24, 1
      %p152 = por %p150, %p151
      %p153 = scmp.ne.s32.totalorder %s142, %s143
      %p154 = scmp.eq.s32.totalorder %s24, 0
      %p155 = por %p153, %p154
      %p156 = scmp.ne.s32.totalorder %s142, %s143
      %p157 = scmp.eq.s32.totalorder %s25, 1
      %p158 = por %p156, %p157
      %p160 = scmp.ne.s32.totalorder %s143, %s159
      %p161 = scmp.eq.s32.totalorder %s25, 0
      %p162 = por %p160, %p161
      %p163 = scmp.le.s32.totalorder 1, %s19
      %p164 = scmp.lt.s32.totalorder %s19, 3
      %p165 = pnand %p163, %p164
      %p166 = pneg %p165
      // Predicated region
      $region9: #{down_block_nhwc.1} parent=5 // pred_check
        _
      $region10: #{down_block_nhwc.1} parent=5 // pred_check_branch
        %168 = sbr.rel (%p165) target = $region12
      $region11: #{down_block_nhwc.1} parent=5 // pred_region
        %s169 = ssub.s32 %s19, 1
        // Predicated region
        $region13: #{down_block_nhwc.1} parent=11 // pred_check
          %p170 = pneg %p66
        $region14: #{down_block_nhwc.1} parent=11 // pred_check_branch
          %172 = sbr.rel (%p170) target = $region16
        $region15: #{down_block_nhwc.1} parent=11 // pred_region
          %s174 = ssub.s32 640, 640
          %175 = vsyncadd [#allocation8], %s174
          %s176 = sshll.u32 [#allocation7], 4
          %s177 = int_to_ptr.vmem [resolvable:$true] %s176
          %182 = dma.hbm_to_vmem [thread:$0]  %s1, 640, %s177, [#allocation8], 128, 128, 8
        $region16: #{down_block_nhwc.1} parent=11 // pred_fallthru
          _
        // Predicated region
        $region17: #{down_block_nhwc.1} parent=11 // pred_check
          %p183 = pneg %p87
        $region18: #{down_block_nhwc.1} parent=11 // pred_check_branch
          %185 = sbr.rel (%p183) target = $region20
        $region19: #{down_block_nhwc.1} parent=11 // pred_region
          %s187 = ssub.s32 16, 16
          %188 = vsyncadd [#allocation8], %s187
          %s190 = sshll.u32 [#allocation9], 4
          %s191 = int_to_ptr.vmem [resolvable:$true] %s190
          %193 = dma.hbm_to_vmem [thread:$0]  %s2, 16, %s191, [#allocation8]
        $region20: #{down_block_nhwc.1} parent=11 // pred_fallthru
          _
        // Predicated region
        $region21: #{down_block_nhwc.1} parent=11 // pred_check
          %p194 = pneg %p108
        $region22: #{down_block_nhwc.1} parent=11 // pred_check_branch
          %196 = sbr.rel (%p194) target = $region24
        $region23: #{down_block_nhwc.1} parent=11 // pred_region
          %s198 = ssub.s32 128, 128
          %199 = vsyncadd [#allocation11], %s198
          %s201 = sshll.u32 [#allocation10], 4
          %s202 = int_to_ptr.vmem [resolvable:$true] %s201
          %204 = dma.hbm_to_vmem [thread:$0]  %s3, 128, %s202, [#allocation11]
        $region24: #{down_block_nhwc.1} parent=11 // pred_fallthru
          _
        // Predicated region
        $region25: #{down_block_nhwc.1} parent=11 // pred_check
          %p205 = pneg %p129
        $region26: #{down_block_nhwc.1} parent=11 // pred_check_branch
          %207 = sbr.rel (%p205) target = $region28
        $region27: #{down_block_nhwc.1} parent=11 // pred_region
          %s209 = ssub.s32 128, 128
          %210 = vsyncadd [#allocation11], %s209
          %s212 = sshll.u32 [#allocation12], 4
          %s213 = int_to_ptr.vmem [resolvable:$true] %s212
          %215 = dma.hbm_to_vmem [thread:$0]  %s4, 128, %s213, [#allocation11]
        $region28: #{down_block_nhwc.1} parent=11 // pred_fallthru
          _
      $region12: #{down_block_nhwc.1} parent=5 // pred_fallthru
        _
      %p216 = scmp.lt.s32.totalorder %s19, 2
      // Predicated region
      $region29: #{down_block_nhwc.1} parent=5 // pred_check
        %p217 = pneg %p216
      $region30: #{down_block_nhwc.1} parent=5 // pred_check_branch
        %219 = sbr.rel (%p217) target = $region32
      $region31: #{down_block_nhwc.1} parent=5 // pred_region
        // Predicated region
        $region33: #{down_block_nhwc.1} parent=31 // pred_check
          %p220 = pneg %p39
        $region34: #{down_block_nhwc.1} parent=31 // pred_check_branch
          %222 = sbr.rel (%p220) target = $region36
        $region35: #{down_block_nhwc.1} parent=31 // pred_region
          %s223 = sand.u32 %s29, 1
          %s224 = scalar_lea.sflag [#allocation5], %s223
          %s225 = sand.u32 %s29, 1
          %s226 = smul.addr %s225, 128
          %s227 = scalar_lea.vmem [#allocation4], %s226
          %s229 = ssub.s32 2048, 2048
          %230 = vsyncadd %s224, %s229
          %s231 = smul.addr %s19, 16
          %s232 = smul.addr %s231, 128
          %s233 = scalar_lea.hbm %s0, %s232
          %s234 = sshll.u32 %s227, 4
          %s235 = int_to_ptr.vmem [resolvable:$true] %s234
          %240 = dma.hbm_to_vmem [thread:$0]  %s233, 2048, %s235, %s224, 128, 128, 8
        $region36: #{down_block_nhwc.1} parent=31 // pred_fallthru
          _
      $region32: #{down_block_nhwc.1} parent=5 // pred_fallthru
        _
      %p241 = scmp.le.s32.totalorder 1, %s19
      %p242 = scmp.lt.s32.totalorder %s19, 3
      %p243 = pnand %p241, %p242
      %p244 = pneg %p243
      // Predicated region
      $region37: #{down_block_nhwc.1} parent=5 // pred_check
        _
      $region38: #{down_block_nhwc.1} parent=5 // pred_check_branch
        %246 = sbr.rel (%p243) target = $region40
      $region39: #{down_block_nhwc.1} parent=5 // pred_region
        %s247 = ssub.s32 %s19, 1
        %s248 = sand.u32 %s32, 1
        %s249 = scalar_lea.sflag [#allocation5], %s248
        %s250 = sand.u32 %s32, 1
        %s251 = smul.addr %s250, 128
        %s252 = scalar_lea.vmem [#allocation4], %s251
        // Predicated region
        $region41: #{down_block_nhwc.1} parent=39 // pred_check
          %p253 = pneg %p45
        $region42: #{down_block_nhwc.1} parent=39 // pred_check_branch
          %255 = sbr.rel (%p253) target = $region44
        $region43: #{down_block_nhwc.1} parent=39 // pred_region
          %256 = dma.done %s249, 2048
        $region44: #{down_block_nhwc.1} parent=39 // pred_fallthru
          _
        // Predicated region
        $region45: #{down_block_nhwc.1} parent=39 // pred_check
          %p257 = pneg %p66
        $region46: #{down_block_nhwc.1} parent=39 // pred_check_branch
          %259 = sbr.rel (%p257) target = $region48
        $region47: #{down_block_nhwc.1} parent=39 // pred_region
          %260 = dma.done [#allocation8], 640
        $region48: #{down_block_nhwc.1} parent=39 // pred_fallthru
          _
        // Predicated region
        $region49: #{down_block_nhwc.1} parent=39 // pred_check
          %p261 = pneg %p87
        $region50: #{down_block_nhwc.1} parent=39 // pred_check_branch
          %263 = sbr.rel (%p261) target = $region52
        $region51: #{down_block_nhwc.1} parent=39 // pred_region
          %264 = dma.done [#allocation8], 16
        $region52: #{down_block_nhwc.1} parent=39 // pred_fallthru
          _
        // Predicated region
        $region53: #{down_block_nhwc.1} parent=39 // pred_check
          %p265 = pneg %p108
        $region54: #{down_block_nhwc.1} parent=39 // pred_check_branch
          %267 = sbr.rel (%p265) target = $region56
        $region55: #{down_block_nhwc.1} parent=39 // pred_region
          %268 = dma.done [#allocation11], 128
        $region56: #{down_block_nhwc.1} parent=39 // pred_fallthru
          _
        // Predicated region
        $region57: #{down_block_nhwc.1} parent=39 // pred_check
          %p269 = pneg %p129
        $region58: #{down_block_nhwc.1} parent=39 // pred_check_branch
          %271 = sbr.rel (%p269) target = $region60
        $region59: #{down_block_nhwc.1} parent=39 // pred_region
          %272 = dma.done [#allocation11], 128
        $region60: #{down_block_nhwc.1} parent=39 // pred_fallthru
          _
        %s273 = sand.u32 %s32, 1
        %s274 = scalar_lea.sflag [#allocation5], %s273
        %s275 = sand.u32 %s32, 1
        %s276 = smul.addr %s275, 128
        %s277 = scalar_lea.vmem [#allocation4], %s276
        %p278 = pneg %p45
        %p279 = pneg %p42
        %p280 = pneg %p66
        %p281 = pneg %p63
        %p282 = pneg %p87
        %p283 = pneg %p84
        %p284 = pneg %p108
        %p285 = pneg %p105
        %p286 = pneg %p129
        %p287 = pneg %p126
        %p288 = pneg %p155
        %p289 = pneg %p152
        %s290 = sand.u32 %s142, 1
        %s291 = scalar_lea.sflag [#allocation6], %s290
        %s292 = sand.u32 %s142, 1
        %s293 = smul.addr %s292, 8
        %s294 = scalar_lea.vmem [#allocation13], %s293
        %v295 = vld [vmem:[%s252] sm:$0xff]
        %v296 = vld [vmem:[%s252 + $0x8] sm:$0xff]
        %v297 = vld [vmem:[%s252 + $0x10] sm:$0xff]
        %v298 = vld [vmem:[%s252 + $0x18] sm:$0xff]
        %v299 = vld [vmem:[%s252 + $0x20] sm:$0xff]
        %v300 = vld [vmem:[%s252 + $0x28] sm:$0xff]
        %v301 = vld [vmem:[%s252 + $0x30] sm:$0xff]
        %v302 = vld [vmem:[%s252 + $0x38] sm:$0xff]
        %v303 = vld [vmem:[%s252 + $0x40] sm:$0xff]
        %v304 = vld [vmem:[%s252 + $0x48] sm:$0xff]
        %v305 = vld [vmem:[%s252 + $0x50] sm:$0xff]
        %v306 = vld [vmem:[%s252 + $0x58] sm:$0xff]
        %v307 = vld [vmem:[%s252 + $0x60] sm:$0xff]
        %v308 = vld [vmem:[%s252 + $0x68] sm:$0xff]
        %v309 = vld [vmem:[%s252 + $0x70] sm:$0xff]
        %v310 = vld [vmem:[%s252 + $0x78] sm:$0xff]
        %v311 = vmax.f32 %v295, %v296
        %v312 = vmax.f32 %v297, %v298
        %v313 = vmax.f32 %v299, %v300
        %v314 = vmax.f32 %v301, %v302
        %v315 = vmax.f32 %v303, %v304
        %v316 = vmax.f32 %v305, %v306
        %v317 = vmax.f32 %v307, %v308
        %v318 = vmax.f32 %v309, %v310
        %327 = vrot.lane.b32.xlu0 %v311, 124
        %v328 = vpop.permute.xlu0 %327
        %329 = vrot.lane.b32.xlu0 %v312, 124
        %v330 = vpop.permute.xlu0 %329
        %331 = vrot.lane.b32.xlu0 %v313, 124
        %v332 = vpop.permute.xlu0 %331
        %333 = vrot.lane.b32.xlu0 %v314, 124
        %v334 = vpop.permute.xlu0 %333
        %335 = vrot.lane.b32.xlu0 %v315, 124
        %v336 = vpop.permute.xlu0 %335
        %337 = vrot.lane.b32.xlu0 %v316, 124
        %v338 = vpop.permute.xlu0 %337
        %339 = vrot.lane.b32.xlu0 %v317, 124
        %v340 = vpop.permute.xlu0 %339
        %341 = vrot.lane.b32.xlu0 %v318, 124
        %v342 = vpop.permute.xlu0 %341
        %v351 = vmax.f32 %v311, %v328
        %v352 = vmax.f32 %v312, %v330
        %v353 = vmax.f32 %v313, %v332
        %v354 = vmax.f32 %v314, %v334
        %v355 = vmax.f32 %v315, %v336
        %v356 = vmax.f32 %v316, %v338
        %v357 = vmax.f32 %v317, %v340
        %v358 = vmax.f32 %v318, %v342
        %vm359 = vcmask 31744
        %360 = vst.msk [vmem:[#allocation2] sm:$0xff] %vm359, 0.0
        %vm361 = vcmask 25600
        %362 = vst.msk [vmem:[#allocation2 + $0x8] sm:$0x3] %vm361, 0.0
        %s363 = scalar_lea.vmem [#allocation2], 144
        %364 = vst.msk [vmem:[%s363] sm:$0xff] %vm359, 0.0
        %365 = vst.msk [vmem:[%s363 + $0x8] sm:$0x3] %vm361, 0.0
        %vm366 = vcmask 24576
        %367 = vst.msk [vmem:[#allocation2] sm:$0x1] %vm366, 0.0
        %368 = vst.msk [vmem:[#allocation2 + $0x10] sm:$0x1] %vm366, 0.0
        %369 = vst.msk [vmem:[#allocation2 + $0x20] sm:$0x1] %vm366, 0.0
        %370 = vst.msk [vmem:[#allocation2 + $0x30] sm:$0x1] %vm366, 0.0
        %371 = vst.msk [vmem:[#allocation2 + $0x40] sm:$0x1] %vm366, 0.0
        %372 = vst.msk [vmem:[#allocation2 + $0x50] sm:$0x1] %vm366, 0.0
        %373 = vst.msk [vmem:[#allocation2 + $0x60] sm:$0x1] %vm366, 0.0
        %374 = vst.msk [vmem:[#allocation2 + $0x70] sm:$0x1] %vm366, 0.0
        %375 = vst.msk [vmem:[#allocation2 + $0x80] sm:$0x1] %vm366, 0.0
        %376 = vst.msk [vmem:[#allocation2 + $0x90] sm:$0x1] %vm366, 0.0
        %377 = vst.msk [vmem:[#allocation2 + $0x9] sm:$0x1] %vm366, 0.0
        %378 = vst.msk [vmem:[#allocation2 + $0x19] sm:$0x1] %vm366, 0.0
        %379 = vst.msk [vmem:[#allocation2 + $0x29] sm:$0x1] %vm366, 0.0
        %380 = vst.msk [vmem:[#allocation2 + $0x39] sm:$0x1] %vm366, 0.0
        %381 = vst.msk [vmem:[#allocation2 + $0x49] sm:$0x1] %vm366, 0.0
        %382 = vst.msk [vmem:[#allocation2 + $0x59] sm:$0x1] %vm366, 0.0
        %383 = vst.msk [vmem:[#allocation2 + $0x69] sm:$0x1] %vm366, 0.0
        %384 = vst.msk [vmem:[#allocation2 + $0x79] sm:$0x1] %vm366, 0.0
        %385 = vst.msk [vmem:[#allocation2 + $0x89] sm:$0x1] %vm366, 0.0
        %386 = vst.msk [vmem:[#allocation2 + $0x99] sm:$0x1] %vm366, 0.0
        %s387 = scalar_lea.vmem [#allocation2], 16
        %388 = vst.msk [vmem:[%s387 + $0x1] sm:$0xff] %vm359, %v351
        %389 = vst.msk [vmem:[%s387 + $0x11] sm:$0xff] %vm359, %v352
        %390 = vst.msk [vmem:[%s387 + $0x21] sm:$0xff] %vm359, %v353
        %391 = vst.msk [vmem:[%s387 + $0x31] sm:$0xff] %vm359, %v354
        %392 = vst.msk [vmem:[%s387 + $0x41] sm:$0xff] %vm359, %v355
        %393 = vst.msk [vmem:[%s387 + $0x51] sm:$0xff] %vm359, %v356
        %394 = vst.msk [vmem:[%s387 + $0x61] sm:$0xff] %vm359, %v357
        %395 = vst.msk [vmem:[%s387 + $0x71] sm:$0xff] %vm359, %v358
        %v396 = vld [vmem:[#allocation2] sm:$0xff]
        %v397 = vld [vmem:[#allocation2 + $0x10] sm:$0xff]
        %v398 = vld [vmem:[#allocation2 + $0x20] sm:$0xff]
        %v399 = vld [vmem:[#allocation2 + $0x30] sm:$0xff]
        %v400 = vld [vmem:[#allocation2 + $0x40] sm:$0xff]
        %v401 = vld [vmem:[#allocation2 + $0x50] sm:$0xff]
        %v402 = vld [vmem:[#allocation2 + $0x60] sm:$0xff]
        %v403 = vld [vmem:[#allocation2 + $0x70] sm:$0xff]
        %v404 = vld [vmem:[#allocation2 + $0x1] sm:$0xff]
        %v405 = vld [vmem:[#allocation2 + $0x11] sm:$0xff]
        %v406 = vld [vmem:[#allocation2 + $0x21] sm:$0xff]
        %v407 = vld [vmem:[#allocation2 + $0x31] sm:$0xff]
        %v408 = vld [vmem:[#allocation2 + $0x41] sm:$0xff]
        %v409 = vld [vmem:[#allocation2 + $0x51] sm:$0xff]
        %v410 = vld [vmem:[#allocation2 + $0x61] sm:$0xff]
        %v411 = vld [vmem:[#allocation2 + $0x71] sm:$0xff]
        %v412 = vld [vmem:[#allocation2 + $0x2] sm:$0xff]
        %v413 = vld [vmem:[#allocation2 + $0x12] sm:$0xff]
        %v414 = vld [vmem:[#allocation2 + $0x22] sm:$0xff]
        %v415 = vld [vmem:[#allocation2 + $0x32] sm:$0xff]
        %v416 = vld [vmem:[#allocation2 + $0x42] sm:$0xff]
        %v417 = vld [vmem:[#allocation2 + $0x52] sm:$0xff]
        %v418 = vld [vmem:[#allocation2 + $0x62] sm:$0xff]
        %v419 = vld [vmem:[#allocation2 + $0x72] sm:$0xff]
        %v420 = vld [vmem:[%s387] sm:$0xff]
        %v421 = vld [vmem:[%s387 + $0x10] sm:$0xff]
        %v422 = vld [vmem:[%s387 + $0x20] sm:$0xff]
        %v423 = vld [vmem:[%s387 + $0x30] sm:$0xff]
        %v424 = vld [vmem:[%s387 + $0x40] sm:$0xff]
        %v425 = vld [vmem:[%s387 + $0x50] sm:$0xff]
        %v426 = vld [vmem:[%s387 + $0x60] sm:$0xff]
        %v427 = vld [vmem:[%s387 + $0x70] sm:$0xff]
        %v428 = vld [vmem:[%s387 + $0x1] sm:$0xff]
        %v429 = vld [vmem:[%s387 + $0x11] sm:$0xff]
        %v430 = vld [vmem:[%s387 + $0x21] sm:$0xff]
        %v431 = vld [vmem:[%s387 + $0x31] sm:$0xff]
        %v432 = vld [vmem:[%s387 + $0x41] sm:$0xff]
        %v433 = vld [vmem:[%s387 + $0x51] sm:$0xff]
        %v434 = vld [vmem:[%s387 + $0x61] sm:$0xff]
        %v435 = vld [vmem:[%s387 + $0x71] sm:$0xff]
        %v436 = vld [vmem:[%s387 + $0x2] sm:$0xff]
        %v437 = vld [vmem:[%s387 + $0x12] sm:$0xff]
        %v438 = vld [vmem:[%s387 + $0x22] sm:$0xff]
        %v439 = vld [vmem:[%s387 + $0x32] sm:$0xff]
        %v440 = vld [vmem:[%s387 + $0x42] sm:$0xff]
        %v441 = vld [vmem:[%s387 + $0x52] sm:$0xff]
        %v442 = vld [vmem:[%s387 + $0x62] sm:$0xff]
        %v443 = vld [vmem:[%s387 + $0x72] sm:$0xff]
        %s444 = scalar_lea.vmem [#allocation2], 32
        %v445 = vld [vmem:[%s444] sm:$0xff]
        %v446 = vld [vmem:[%s444 + $0x10] sm:$0xff]
        %v447 = vld [vmem:[%s444 + $0x20] sm:$0xff]
        %v448 = vld [vmem:[%s444 + $0x30] sm:$0xff]
        %v449 = vld [vmem:[%s444 + $0x40] sm:$0xff]
        %v450 = vld [vmem:[%s444 + $0x50] sm:$0xff]
        %v451 = vld [vmem:[%s444 + $0x60] sm:$0xff]
        %v452 = vld [vmem:[%s444 + $0x70] sm:$0xff]
        %v453 = vld [vmem:[%s444 + $0x1] sm:$0xff]
        %v454 = vld [vmem:[%s444 + $0x11] sm:$0xff]
        %v455 = vld [vmem:[%s444 + $0x21] sm:$0xff]
        %v456 = vld [vmem:[%s444 + $0x31] sm:$0xff]
        %v457 = vld [vmem:[%s444 + $0x41] sm:$0xff]
        %v458 = vld [vmem:[%s444 + $0x51] sm:$0xff]
        %v459 = vld [vmem:[%s444 + $0x61] sm:$0xff]
        %v460 = vld [vmem:[%s444 + $0x71] sm:$0xff]
        %v461 = vld [vmem:[%s444 + $0x2] sm:$0xff]
        %v462 = vld [vmem:[%s444 + $0x12] sm:$0xff]
        %v463 = vld [vmem:[%s444 + $0x22] sm:$0xff]
        %v464 = vld [vmem:[%s444 + $0x32] sm:$0xff]
        %v465 = vld [vmem:[%s444 + $0x42] sm:$0xff]
        %v466 = vld [vmem:[%s444 + $0x52] sm:$0xff]
        %v467 = vld [vmem:[%s444 + $0x62] sm:$0xff]
        %v468 = vld [vmem:[%s444 + $0x72] sm:$0xff]
        %477 = vrot.lane.b32.xlu0 %v404, 4
        %v478 = vpop.permute.xlu0 %477
        %479 = vrot.lane.b32.xlu0 %v405, 4
        %v480 = vpop.permute.xlu0 %479
        %481 = vrot.lane.b32.xlu0 %v406, 4
        %v482 = vpop.permute.xlu0 %481
        %483 = vrot.lane.b32.xlu0 %v407, 4
        %v484 = vpop.permute.xlu0 %483
        %485 = vrot.lane.b32.xlu0 %v408, 4
        %v486 = vpop.permute.xlu0 %485
        %487 = vrot.lane.b32.xlu0 %v409, 4
        %v488 = vpop.permute.xlu0 %487
        %489 = vrot.lane.b32.xlu0 %v410, 4
        %v490 = vpop.permute.xlu0 %489
        %491 = vrot.lane.b32.xlu0 %v411, 4
        %v492 = vpop.permute.xlu0 %491
        %509 = vrot.lane.b32.xlu0 %v412, 8
        %v510 = vpop.permute.xlu0 %509
        %511 = vrot.lane.b32.xlu0 %v413, 8
        %v512 = vpop.permute.xlu0 %511
        %513 = vrot.lane.b32.xlu0 %v414, 8
        %v514 = vpop.permute.xlu0 %513
        %515 = vrot.lane.b32.xlu0 %v415, 8
        %v516 = vpop.permute.xlu0 %515
        %517 = vrot.lane.b32.xlu0 %v416, 8
        %v518 = vpop.permute.xlu0 %517
        %519 = vrot.lane.b32.xlu0 %v417, 8
        %v520 = vpop.permute.xlu0 %519
        %521 = vrot.lane.b32.xlu0 %v418, 8
        %v522 = vpop.permute.xlu0 %521
        %523 = vrot.lane.b32.xlu0 %v419, 8
        %v524 = vpop.permute.xlu0 %523
        %541 = vrot.lane.b32.xlu0 %v420, 12
        %v542 = vpop.permute.xlu0 %541
        %543 = vrot.lane.b32.xlu0 %v421, 12
        %v544 = vpop.permute.xlu0 %543
        %545 = vrot.lane.b32.xlu0 %v422, 12
        %v546 = vpop.permute.xlu0 %545
        %547 = vrot.lane.b32.xlu0 %v423, 12
        %v548 = vpop.permute.xlu0 %547
        %549 = vrot.lane.b32.xlu0 %v424, 12
        %v550 = vpop.permute.xlu0 %549
        %551 = vrot.lane.b32.xlu0 %v425, 12
        %v552 = vpop.permute.xlu0 %551
        %553 = vrot.lane.b32.xlu0 %v426, 12
        %v554 = vpop.permute.xlu0 %553
        %555 = vrot.lane.b32.xlu0 %v427, 12
        %v556 = vpop.permute.xlu0 %555
        %573 = vrot.lane.b32.xlu0 %v428, 16
        %v574 = vpop.permute.xlu0 %573
        %575 = vrot.lane.b32.xlu0 %v429, 16
        %v576 = vpop.permute.xlu0 %575
        %577 = vrot.lane.b32.xlu0 %v430, 16
        %v578 = vpop.permute.xlu0 %577
        %579 = vrot.lane.b32.xlu0 %v431, 16
        %v580 = vpop.permute.xlu0 %579
        %581 = vrot.lane.b32.xlu0 %v432, 16
        %v582 = vpop.permute.xlu0 %581
        %583 = vrot.lane.b32.xlu0 %v433, 16
        %v584 = vpop.permute.xlu0 %583
        %585 = vrot.lane.b32.xlu0 %v434, 16
        %v586 = vpop.permute.xlu0 %585
        %587 = vrot.lane.b32.xlu0 %v435, 16
        %v588 = vpop.permute.xlu0 %587
        %605 = vrot.lane.b32.xlu0 %v436, 20
        %v606 = vpop.permute.xlu0 %605
        %607 = vrot.lane.b32.xlu0 %v437, 20
        %v608 = vpop.permute.xlu0 %607
        %609 = vrot.lane.b32.xlu0 %v438, 20
        %v610 = vpop.permute.xlu0 %609
        %611 = vrot.lane.b32.xlu0 %v439, 20
        %v612 = vpop.permute.xlu0 %611
        %613 = vrot.lane.b32.xlu0 %v440, 20
        %v614 = vpop.permute.xlu0 %613
        %615 = vrot.lane.b32.xlu0 %v441, 20
        %v616 = vpop.permute.xlu0 %615
        %617 = vrot.lane.b32.xlu0 %v442, 20
        %v618 = vpop.permute.xlu0 %617
        %619 = vrot.lane.b32.xlu0 %v443, 20
        %v620 = vpop.permute.xlu0 %619
        %637 = vrot.lane.b32.xlu0 %v445, 24
        %v638 = vpop.permute.xlu0 %637
        %639 = vrot.lane.b32.xlu0 %v446, 24
        %v640 = vpop.permute.xlu0 %639
        %641 = vrot.lane.b32.xlu0 %v447, 24
        %v642 = vpop.permute.xlu0 %641
        %643 = vrot.lane.b32.xlu0 %v448, 24
        %v644 = vpop.permute.xlu0 %643
        %645 = vrot.lane.b32.xlu0 %v449, 24
        %v646 = vpop.permute.xlu0 %645
        %647 = vrot.lane.b32.xlu0 %v450, 24
        %v648 = vpop.permute.xlu0 %647
        %649 = vrot.lane.b32.xlu0 %v451, 24
        %v650 = vpop.permute.xlu0 %649
        %651 = vrot.lane.b32.xlu0 %v452, 24
        %v652 = vpop.permute.xlu0 %651
        %669 = vrot.lane.b32.xlu0 %v453, 28
        %v670 = vpop.permute.xlu0 %669
        %671 = vrot.lane.b32.xlu0 %v454, 28
        %v672 = vpop.permute.xlu0 %671
        %673 = vrot.lane.b32.xlu0 %v455, 28
        %v674 = vpop.permute.xlu0 %673
        %675 = vrot.lane.b32.xlu0 %v456, 28
        %v676 = vpop.permute.xlu0 %675
        %677 = vrot.lane.b32.xlu0 %v457, 28
        %v678 = vpop.permute.xlu0 %677
        %679 = vrot.lane.b32.xlu0 %v458, 28
        %v680 = vpop.permute.xlu0 %679
        %681 = vrot.lane.b32.xlu0 %v459, 28
        %v682 = vpop.permute.xlu0 %681
        %683 = vrot.lane.b32.xlu0 %v460, 28
        %v684 = vpop.permute.xlu0 %683
        %701 = vrot.lane.b32.xlu0 %v461, 32
        %v702 = vpop.permute.xlu0 %701
        %703 = vrot.lane.b32.xlu0 %v462, 32
        %v704 = vpop.permute.xlu0 %703
        %705 = vrot.lane.b32.xlu0 %v463, 32
        %v706 = vpop.permute.xlu0 %705
        %707 = vrot.lane.b32.xlu0 %v464, 32
        %v708 = vpop.permute.xlu0 %707
        %709 = vrot.lane.b32.xlu0 %v465, 32
        %v710 = vpop.permute.xlu0 %709
        %711 = vrot.lane.b32.xlu0 %v466, 32
        %v712 = vpop.permute.xlu0 %711
        %713 = vrot.lane.b32.xlu0 %v467, 32
        %v714 = vpop.permute.xlu0 %713
        %715 = vrot.lane.b32.xlu0 %v468, 32
        %v716 = vpop.permute.xlu0 %715
        %v725 = vsel %vm359, %v396, %v478
        %v726 = vsel %vm359, %v397, %v480
        %v727 = vsel %vm359, %v398, %v482
        %v728 = vsel %vm359, %v399, %v484
        %v729 = vsel %vm359, %v400, %v486
        %v730 = vsel %vm359, %v401, %v488
        %v731 = vsel %vm359, %v402, %v490
        %v732 = vsel %vm359, %v403, %v492
        %vm733 = vcmask 64512
        %v734 = vsel %vm733, %v725, %v510
        %v735 = vsel %vm733, %v726, %v512
        %v736 = vsel %vm733, %v727, %v514
        %v737 = vsel %vm733, %v728, %v516
        %v738 = vsel %vm733, %v729, %v518
        %v739 = vsel %vm733, %v730, %v520
        %v740 = vsel %vm733, %v731, %v522
        %v741 = vsel %vm733, %v732, %v524
        %vm742 = vcmask 97280
        %v743 = vsel %vm742, %v734, %v542
        %v744 = vsel %vm742, %v735, %v544
        %v745 = vsel %vm742, %v736, %v546
        %v746 = vsel %vm742, %v737, %v548
        %v747 = vsel %vm742, %v738, %v550
        %v748 = vsel %vm742, %v739, %v552
        %v749 = vsel %vm742, %v740, %v554
        %v750 = vsel %vm742, %v741, %v556
        %vm751 = vcmask 130048
        %v752 = vsel %vm751, %v743, %v574
        %v753 = vsel %vm751, %v744, %v576
        %v754 = vsel %vm751, %v745, %v578
        %v755 = vsel %vm751, %v746, %v580
        %v756 = vsel %vm751, %v747, %v582
        %v757 = vsel %vm751, %v748, %v584
        %v758 = vsel %vm751, %v749, %v586
        %v759 = vsel %vm751, %v750, %v588
        %vm760 = vcmask 162816
        %v761 = vsel %vm760, %v752, %v606
        %v762 = vsel %vm760, %v753, %v608
        %v763 = vsel %vm760, %v754, %v610
        %v764 = vsel %vm760, %v755, %v612
        %v765 = vsel %vm760, %v756, %v614
        %v766 = vsel %vm760, %v757, %v616
        %v767 = vsel %vm760, %v758, %v618
        %v768 = vsel %vm760, %v759, %v620
        %vm769 = vcmask 195584
        %v770 = vsel %vm769, %v761, %v638
        %v771 = vsel %vm769, %v762, %v640
        %v772 = vsel %vm769, %v763, %v642
        %v773 = vsel %vm769, %v764, %v644
        %v774 = vsel %vm769, %v765, %v646
        %v775 = vsel %vm769, %v766, %v648
        %v776 = vsel %vm769, %v767, %v650
        %v777 = vsel %vm769, %v768, %v652
        %vm778 = vcmask 228352
        %v779 = vsel %vm778, %v770, %v670
        %v780 = vsel %vm778, %v771, %v672
        %v781 = vsel %vm778, %v772, %v674
        %v782 = vsel %vm778, %v773, %v676
        %v783 = vsel %vm778, %v774, %v678
        %v784 = vsel %vm778, %v775, %v680
        %v785 = vsel %vm778, %v776, %v682
        %v786 = vsel %vm778, %v777, %v684
        %vm787 = vcmask 261120
        %v788 = vsel %vm787, %v779, %v702
        %v789 = vsel %vm787, %v780, %v704
        %v790 = vsel %vm787, %v781, %v706
        %v791 = vsel %vm787, %v782, %v708
        %v792 = vsel %vm787, %v783, %v710
        %v793 = vsel %vm787, %v784, %v712
        %v794 = vsel %vm787, %v785, %v714
        %v795 = vsel %vm787, %v786, %v716
        %v796 = vld [vmem:[#allocation7] sm:$0xff]
        %v797 = vld [vmem:[#allocation7 + $0x8] sm:$0xff]
        %v798 = vld [vmem:[#allocation7 + $0x10] sm:$0xff]
        %v799 = vld [vmem:[#allocation7 + $0x18] sm:$0xff]
        %v800 = vld [vmem:[#allocation7 + $0x20] sm:$0xf]
        %v801 = vld [vmem:[#allocation9] sm:$0x1]
        %v803 = vlaneseq
        %v804 = vshrl.u32 %v803, 7
        %v805 = vsub.s32 0, %v804
        %v806 = vrot.slane %v801, %v805
        %vm808 = vcmask 293888
        %v810 = vsel %vm808, %v788, 0
        %v813 = vsel %vm808, %v789, 0
        %v816 = vsel %vm808, %v790, 0
        %v819 = vsel %vm808, %v791, 0
        %v822 = vsel %vm808, %v792, 0
        %v825 = vsel %vm808, %v793, 0
        %v828 = vsel %vm808, %v794, 0
        %v831 = vsel %vm808, %v795, 0
        %vm833 = vcmask 1043456
        %v835 = vsel %vm833, %v800, 0
        %837 = vmatprep.subr.mxu0 0.0
        %838 = vmatpush1.msra.mxu0 %v796
        %839 = vmatprep.subr.mxu0 0.0
        %840 = vmatpush1.msra.mxu0 %v797
        %841 = vmatprep.subr.mxu0 0.0
        %842 = vmatpush1.msra.mxu0 %v798
        %843 = vmatprep.subr.mxu0 0.0
        %844 = vmatpush1.msra.mxu0 %v799
        %845 = vmatprep.subr.mxu0 0.0
        %846 = vmatpush1.msra.mxu0 %v835
        %847 = vmatprep.subr.mxu0 0.0
        %848 = vmatpush1.msra.mxu0 0.0
        %849 = vmatprep.subr.mxu0 0.0
        %850 = vmatpush1.msra.mxu0 0.0
        %851 = vmatprep.subr.mxu0 0.0
        %852 = vmatpush1.msra.mxu0 0.0
        %853 = vmatprep.subr.mxu0 0.0
        %854 = vmatpush1.msra.mxu0 0.0
        %855 = vmatprep.subr.mxu0 0.0
        %856 = vmatpush1.msra.mxu0 0.0
        %857 = vmatprep.subr.mxu0 0.0
        %858 = vmatpush1.msra.mxu0 0.0
        %859 = vmatprep.subr.mxu0 0.0
        %860 = vmatpush1.msra.mxu0 0.0
        %861 = vmatprep.subr.mxu0 0.0
        %862 = vmatpush1.msra.mxu0 0.0
        %863 = vmatprep.subr.mxu0 0.0
        %864 = vmatpush1.msra.mxu0 0.0
        %865 = vmatprep.subr.mxu0 0.0
        %866 = vmatpush1.msra.mxu0 0.0
        %867 = vmatprep.subr.mxu0 0.0
        %868 = vmatpush1.msra.mxu0 0.0
        %869 = vmatprep.subr.mxu0 0.0
        %870 = vmatpush1.msra.mxu0 0.0
        %871 = vmatprep.subr.mxu0 0.0
        %872 = vmatpush1.msra.mxu0 0.0
        %873 = vmatprep.subr.mxu0 0.0
        %874 = vmatpush1.msra.mxu0 0.0
        %875 = vmatprep.subr.mxu0 0.0
        %876 = vmatpush1.msra.mxu0 0.0
        %877 = vmatprep.subr.mxu0 0.0
        %878 = vmatpush1.msra.mxu0 0.0
        %879 = vmatprep.subr.mxu0 0.0
        %880 = vmatpush1.msra.mxu0 0.0
        %881 = vmatprep.subr.mxu0 0.0
        %882 = vmatpush1.msra.mxu0 0.0
        %883 = vmatprep.subr.mxu0 0.0
        %884 = vmatpush1.msra.mxu0 0.0
        %885 = vmatprep.subr.mxu0 0.0
        %886 = vmatpush1.msra.mxu0 0.0
        %887 = vmatprep.subr.mxu0 0.0
        %888 = vmatpush1.msra.mxu0 0.0
        %889 = vmatprep.subr.mxu0 0.0
        %890 = vmatpush1.msra.mxu0 0.0
        %891 = vmatprep.subr.mxu0 0.0
        %892 = vmatpush1.msra.mxu0 0.0
        %893 = vmatprep.subr.mxu0 0.0
        %894 = vmatpush1.msra.mxu0 0.0
        %895 = vmatprep.subr.mxu0 0.0
        %896 = vmatpush1.msra.mxu0 0.0
        %897 = vmatprep.subr.mxu0 0.0
        %898 = vmatpush1.msra.mxu0 0.0
        %899 = vmatprep.subr.mxu0 0.0
        %900 = vmatpush1.msra.mxu0 0.0
        %901 = vmatprep.mubr.f32.mxu0 0.0
        %902 = vmatmul.mubr.f32.gmra.mrb[0].mxu0 %v810
        %v903 = vpop.f32.mrb[0].mxu0
        %v904 = vadd.f32 %v806, %v903
        %v905 = vpop.f32.mrb[0].mxu0
        %906 = vmatprep.mubr.f32.mxu0 0.0
        %907 = vmatmul.mubr.f32.gmra.mrb[0].mxu0 %v813
        %v908 = vpop.f32.mrb[0].mxu0
        %v909 = vadd.f32 %v806, %v908
        %v910 = vpop.f32.mrb[0].mxu0
        %911 = vmatprep.mubr.f32.mxu0 0.0
        %912 = vmatmul.mubr.f32.gmra.mrb[0].mxu0 %v816
        %v913 = vpop.f32.mrb[0].mxu0
        %v914 = vadd.f32 %v806, %v913
        %v915 = vpop.f32.mrb[0].mxu0
        %916 = vmatprep.mubr.f32.mxu0 0.0
        %917 = vmatmul.mubr.f32.gmra.mrb[0].mxu0 %v819
        %v918 = vpop.f32.mrb[0].mxu0
        %v919 = vadd.f32 %v806, %v918
        %v920 = vpop.f32.mrb[0].mxu0
        %921 = vmatprep.mubr.f32.mxu0 0.0
        %922 = vmatmul.mubr.f32.gmra.mrb[0].mxu0 %v822
        %v923 = vpop.f32.mrb[0].mxu0
        %v924 = vadd.f32 %v806, %v923
        %v925 = vpop.f32.mrb[0].mxu0
        %926 = vmatprep.mubr.f32.mxu0 0.0
        %927 = vmatmul.mubr.f32.gmra.mrb[0].mxu0 %v825
        %v928 = vpop.f32.mrb[0].mxu0
        %v929 = vadd.f32 %v806, %v928
        %v930 = vpop.f32.mrb[0].mxu0
        %931 = vmatprep.mubr.f32.mxu0 0.0
        %932 = vmatmul.mubr.f32.gmra.mrb[0].mxu0 %v828
        %v933 = vpop.f32.mrb[0].mxu0
        %v934 = vadd.f32 %v806, %v933
        %v935 = vpop.f32.mrb[0].mxu0
        %936 = vmatprep.mubr.f32.mxu0 0.0
        %937 = vmatmul.mubr.f32.gmra.mrb[0].mxu0 %v831
        %v938 = vpop.f32.mrb[0].mxu0
        %v939 = vadd.f32 %v806, %v938
        %v940 = vpop.f32.mrb[0].mxu0
        %941 = vdwg.mxu0
        %v942 = vmax.f32 %v904, 0.0
        %v943 = vmax.f32 %v909, 0.0
        %v944 = vmax.f32 %v914, 0.0
        %v945 = vmax.f32 %v919, 0.0
        %v946 = vmax.f32 %v924, 0.0
        %v947 = vmax.f32 %v929, 0.0
        %v948 = vmax.f32 %v934, 0.0
        %v949 = vmax.f32 %v939, 0.0
        %950 = vst.msk [vmem:[#allocation3] sm:$0xff] %vm733, 0.0
        %vm951 = vcmask 58368
        %952 = vst.msk [vmem:[#allocation3 + $0x8] sm:$0x3] %vm951, 0.0
        %s953 = scalar_lea.vmem [#allocation3], 144
        %954 = vst.msk [vmem:[%s953] sm:$0xff] %vm733, 0.0
        %955 = vst.msk [vmem:[%s953 + $0x8] sm:$0x3] %vm951, 0.0
        %vm956 = vcmask 57344
        %957 = vst.msk [vmem:[#allocation3] sm:$0x1] %vm956, 0.0
        %958 = vst.msk [vmem:[#allocation3 + $0x10] sm:$0x1] %vm956, 0.0
        %959 = vst.msk [vmem:[#allocation3 + $0x20] sm:$0x1] %vm956, 0.0
        %960 = vst.msk [vmem:[#allocation3 + $0x30] sm:$0x1] %vm956, 0.0
        %961 = vst.msk [vmem:[#allocation3 + $0x40] sm:$0x1] %vm956, 0.0
        %962 = vst.msk [vmem:[#allocation3 + $0x50] sm:$0x1] %vm956, 0.0
        %963 = vst.msk [vmem:[#allocation3 + $0x60] sm:$0x1] %vm956, 0.0
        %964 = vst.msk [vmem:[#allocation3 + $0x70] sm:$0x1] %vm956, 0.0
        %965 = vst.msk [vmem:[#allocation3 + $0x80] sm:$0x1] %vm956, 0.0
        %966 = vst.msk [vmem:[#allocation3 + $0x90] sm:$0x1] %vm956, 0.0
        %967 = vst.msk [vmem:[#allocation3 + $0x9] sm:$0x1] %vm956, 0.0
        %968 = vst.msk [vmem:[#allocation3 + $0x19] sm:$0x1] %vm956, 0.0
        %969 = vst.msk [vmem:[#allocation3 + $0x29] sm:$0x1] %vm956, 0.0
        %970 = vst.msk [vmem:[#allocation3 + $0x39] sm:$0x1] %vm956, 0.0
        %971 = vst.msk [vmem:[#allocation3 + $0x49] sm:$0x1] %vm956, 0.0
        %972 = vst.msk [vmem:[#allocation3 + $0x59] sm:$0x1] %vm956, 0.0
        %973 = vst.msk [vmem:[#allocation3 + $0x69] sm:$0x1] %vm956, 0.0
        %974 = vst.msk [vmem:[#allocation3 + $0x79] sm:$0x1] %vm956, 0.0
        %975 = vst.msk [vmem:[#allocation3 + $0x89] sm:$0x1] %vm956, 0.0
        %976 = vst.msk [vmem:[#allocation3 + $0x99] sm:$0x1] %vm956, 0.0
        %s977 = scalar_lea.vmem [#allocation3], 16
        %978 = vst.msk [vmem:[%s977 + $0x1] sm:$0xff] %vm733, %v942
        %979 = vst.msk [vmem:[%s977 + $0x11] sm:$0xff] %vm733, %v943
        %980 = vst.msk [vmem:[%s977 + $0x21] sm:$0xff] %vm733, %v944
        %981 = vst.msk [vmem:[%s977 + $0x31] sm:$0xff] %vm733, %v945
        %982 = vst.msk [vmem:[%s977 + $0x41] sm:$0xff] %vm733, %v946
        %983 = vst.msk [vmem:[%s977 + $0x51] sm:$0xff] %vm733, %v947
        %984 = vst.msk [vmem:[%s977 + $0x61] sm:$0xff] %vm733, %v948
        %985 = vst.msk [vmem:[%s977 + $0x71] sm:$0xff] %vm733, %v949
        %v986 = vld [vmem:[#allocation3] sm:$0xff]
        %v987 = vld [vmem:[#allocation3 + $0x10] sm:$0xff]
        %v988 = vld [vmem:[#allocation3 + $0x20] sm:$0xff]
        %v989 = vld [vmem:[#allocation3 + $0x30] sm:$0xff]
        %v990 = vld [vmem:[#allocation3 + $0x40] sm:$0xff]
        %v991 = vld [vmem:[#allocation3 + $0x50] sm:$0xff]
        %v992 = vld [vmem:[#allocation3 + $0x60] sm:$0xff]
        %v993 = vld [vmem:[#allocation3 + $0x70] sm:$0xff]
        %v994 = vld [vmem:[#allocation3 + $0x1] sm:$0xff]
        %v995 = vld [vmem:[#allocation3 + $0x11] sm:$0xff]
        %v996 = vld [vmem:[#allocation3 + $0x21] sm:$0xff]
        %v997 = vld [vmem:[#allocation3 + $0x31] sm:$0xff]
        %v998 = vld [vmem:[#allocation3 + $0x41] sm:$0xff]
        %v999 = vld [vmem:[#allocation3 + $0x51] sm:$0xff]
        %v1000 = vld [vmem:[#allocation3 + $0x61] sm:$0xff]
        %v1001 = vld [vmem:[#allocation3 + $0x71] sm:$0xff]
        %v1002 = vld [vmem:[#allocation3 + $0x2] sm:$0xff]
        %v1003 = vld [vmem:[#allocation3 + $0x12] sm:$0xff]
        %v1004 = vld [vmem:[#allocation3 + $0x22] sm:$0xff]
        %v1005 = vld [vmem:[#allocation3 + $0x32] sm:$0xff]
        %v1006 = vld [vmem:[#allocation3 + $0x42] sm:$0xff]
        %v1007 = vld [vmem:[#allocation3 + $0x52] sm:$0xff]
        %v1008 = vld [vmem:[#allocation3 + $0x62] sm:$0xff]
        %v1009 = vld [vmem:[#allocation3 + $0x72] sm:$0xff]
        %v1010 = vld [vmem:[%s977] sm:$0xff]
        %v1011 = vld [vmem:[%s977 + $0x10] sm:$0xff]
        %v1012 = vld [vmem:[%s977 + $0x20] sm:$0xff]
        %v1013 = vld [vmem:[%s977 + $0x30] sm:$0xff]
        %v1014 = vld [vmem:[%s977 + $0x40] sm:$0xff]
        %v1015 = vld [vmem:[%s977 + $0x50] sm:$0xff]
        %v1016 = vld [vmem:[%s977 + $0x60] sm:$0xff]
        %v1017 = vld [vmem:[%s977 + $0x70] sm:$0xff]
        %v1018 = vld [vmem:[%s977 + $0x1] sm:$0xff]
        %v1019 = vld [vmem:[%s977 + $0x11] sm:$0xff]
        %v1020 = vld [vmem:[%s977 + $0x21] sm:$0xff]
        %v1021 = vld [vmem:[%s977 + $0x31] sm:$0xff]
        %v1022 = vld [vmem:[%s977 + $0x41] sm:$0xff]
        %v1023 = vld [vmem:[%s977 + $0x51] sm:$0xff]
        %v1024 = vld [vmem:[%s977 + $0x61] sm:$0xff]
        %v1025 = vld [vmem:[%s977 + $0x71] sm:$0xff]
        %v1026 = vld [vmem:[%s977 + $0x2] sm:$0xff]
        %v1027 = vld [vmem:[%s977 + $0x12] sm:$0xff]
        %v1028 = vld [vmem:[%s977 + $0x22] sm:$0xff]
        %v1029 = vld [vmem:[%s977 + $0x32] sm:$0xff]
        %v1030 = vld [vmem:[%s977 + $0x42] sm:$0xff]
        %v1031 = vld [vmem:[%s977 + $0x52] sm:$0xff]
        %v1032 = vld [vmem:[%s977 + $0x62] sm:$0xff]
        %v1033 = vld [vmem:[%s977 + $0x72] sm:$0xff]
        %s1034 = scalar_lea.vmem [#allocation3], 32
        %v1035 = vld [vmem:[%s1034] sm:$0xff]
        %v1036 = vld [vmem:[%s1034 + $0x10] sm:$0xff]
        %v1037 = vld [vmem:[%s1034 + $0x20] sm:$0xff]
        %v1038 = vld [vmem:[%s1034 + $0x30] sm:$0xff]
        %v1039 = vld [vmem:[%s1034 + $0x40] sm:$0xff]
        %v1040 = vld [vmem:[%s1034 + $0x50] sm:$0xff]
        %v1041 = vld [vmem:[%s1034 + $0x60] sm:$0xff]
        %v1042 = vld [vmem:[%s1034 + $0x70] sm:$0xff]
        %v1043 = vld [vmem:[%s1034 + $0x1] sm:$0xff]
        %v1044 = vld [vmem:[%s1034 + $0x11] sm:$0xff]
        %v1045 = vld [vmem:[%s1034 + $0x21] sm:$0xff]
        %v1046 = vld [vmem:[%s1034 + $0x31] sm:$0xff]
        %v1047 = vld [vmem:[%s1034 + $0x41] sm:$0xff]
        %v1048 = vld [vmem:[%s1034 + $0x51] sm:$0xff]
        %v1049 = vld [vmem:[%s1034 + $0x61] sm:$0xff]
        %v1050 = vld [vmem:[%s1034 + $0x71] sm:$0xff]
        %v1051 = vld [vmem:[%s1034 + $0x2] sm:$0xff]
        %v1052 = vld [vmem:[%s1034 + $0x12] sm:$0xff]
        %v1053 = vld [vmem:[%s1034 + $0x22] sm:$0xff]
        %v1054 = vld [vmem:[%s1034 + $0x32] sm:$0xff]
        %v1055 = vld [vmem:[%s1034 + $0x42] sm:$0xff]
        %v1056 = vld [vmem:[%s1034 + $0x52] sm:$0xff]
        %v1057 = vld [vmem:[%s1034 + $0x62] sm:$0xff]
        %v1058 = vld [vmem:[%s1034 + $0x72] sm:$0xff]
        %1067 = vrot.lane.b32.xlu0 %v994, 8
        %v1068 = vpop.permute.xlu0 %1067
        %1069 = vrot.lane.b32.xlu0 %v995, 8
        %v1070 = vpop.permute.xlu0 %1069
        %1071 = vrot.lane.b32.xlu0 %v996, 8
        %v1072 = vpop.permute.xlu0 %1071
        %1073 = vrot.lane.b32.xlu0 %v997, 8
        %v1074 = vpop.permute.xlu0 %1073
        %1075 = vrot.lane.b32.xlu0 %v998, 8
        %v1076 = vpop.permute.xlu0 %1075
        %1077 = vrot.lane.b32.xlu0 %v999, 8
        %v1078 = vpop.permute.xlu0 %1077
        %1079 = vrot.lane.b32.xlu0 %v1000, 8
        %v1080 = vpop.permute.xlu0 %1079
        %1081 = vrot.lane.b32.xlu0 %v1001, 8
        %v1082 = vpop.permute.xlu0 %1081
        %1099 = vrot.lane.b32.xlu0 %v1002, 16
        %v1100 = vpop.permute.xlu0 %1099
        %1101 = vrot.lane.b32.xlu0 %v1003, 16
        %v1102 = vpop.permute.xlu0 %1101
        %1103 = vrot.lane.b32.xlu0 %v1004, 16
        %v1104 = vpop.permute.xlu0 %1103
        %1105 = vrot.lane.b32.xlu0 %v1005, 16
        %v1106 = vpop.permute.xlu0 %1105
        %1107 = vrot.lane.b32.xlu0 %v1006, 16
        %v1108 = vpop.permute.xlu0 %1107
        %1109 = vrot.lane.b32.xlu0 %v1007, 16
        %v1110 = vpop.permute.xlu0 %1109
        %1111 = vrot.lane.b32.xlu0 %v1008, 16
        %v1112 = vpop.permute.xlu0 %1111
        %1113 = vrot.lane.b32.xlu0 %v1009, 16
        %v1114 = vpop.permute.xlu0 %1113
        %1131 = vrot.lane.b32.xlu0 %v1010, 24
        %v1132 = vpop.permute.xlu0 %1131
        %1133 = vrot.lane.b32.xlu0 %v1011, 24
        %v1134 = vpop.permute.xlu0 %1133
        %1135 = vrot.lane.b32.xlu0 %v1012, 24
        %v1136 = vpop.permute.xlu0 %1135
        %1137 = vrot.lane.b32.xlu0 %v1013, 24
        %v1138 = vpop.permute.xlu0 %1137
        %1139 = vrot.lane.b32.xlu0 %v1014, 24
        %v1140 = vpop.permute.xlu0 %1139
        %1141 = vrot.lane.b32.xlu0 %v1015, 24
        %v1142 = vpop.permute.xlu0 %1141
        %1143 = vrot.lane.b32.xlu0 %v1016, 24
        %v1144 = vpop.permute.xlu0 %1143
        %1145 = vrot.lane.b32.xlu0 %v1017, 24
        %v1146 = vpop.permute.xlu0 %1145
        %1163 = vrot.lane.b32.xlu0 %v1018, 32
        %v1164 = vpop.permute.xlu0 %1163
        %1165 = vrot.lane.b32.xlu0 %v1019, 32
        %v1166 = vpop.permute.xlu0 %1165
        %1167 = vrot.lane.b32.xlu0 %v1020, 32
        %v1168 = vpop.permute.xlu0 %1167
        %1169 = vrot.lane.b32.xlu0 %v1021, 32
        %v1170 = vpop.permute.xlu0 %1169
        %1171 = vrot.lane.b32.xlu0 %v1022, 32
        %v1172 = vpop.permute.xlu0 %1171
        %1173 = vrot.lane.b32.xlu0 %v1023, 32
        %v1174 = vpop.permute.xlu0 %1173
        %1175 = vrot.lane.b32.xlu0 %v1024, 32
        %v1176 = vpop.permute.xlu0 %1175
        %1177 = vrot.lane.b32.xlu0 %v1025, 32
        %v1178 = vpop.permute.xlu0 %1177
        %1195 = vrot.lane.b32.xlu0 %v1026, 40
        %v1196 = vpop.permute.xlu0 %1195
        %1197 = vrot.lane.b32.xlu0 %v1027, 40
        %v1198 = vpop.permute.xlu0 %1197
        %1199 = vrot.lane.b32.xlu0 %v1028, 40
        %v1200 = vpop.permute.xlu0 %1199
        %1201 = vrot.lane.b32.xlu0 %v1029, 40
        %v1202 = vpop.permute.xlu0 %1201
        %1203 = vrot.lane.b32.xlu0 %v1030, 40
        %v1204 = vpop.permute.xlu0 %1203
        %1205 = vrot.lane.b32.xlu0 %v1031, 40
        %v1206 = vpop.permute.xlu0 %1205
        %1207 = vrot.lane.b32.xlu0 %v1032, 40
        %v1208 = vpop.permute.xlu0 %1207
        %1209 = vrot.lane.b32.xlu0 %v1033, 40
        %v1210 = vpop.permute.xlu0 %1209
        %1227 = vrot.lane.b32.xlu0 %v1035, 48
        %v1228 = vpop.permute.xlu0 %1227
        %1229 = vrot.lane.b32.xlu0 %v1036, 48
        %v1230 = vpop.permute.xlu0 %1229
        %1231 = vrot.lane.b32.xlu0 %v1037, 48
        %v1232 = vpop.permute.xlu0 %1231
        %1233 = vrot.lane.b32.xlu0 %v1038, 48
        %v1234 = vpop.permute.xlu0 %1233
        %1235 = vrot.lane.b32.xlu0 %v1039, 48
        %v1236 = vpop.permute.xlu0 %1235
        %1237 = vrot.lane.b32.xlu0 %v1040, 48
        %v1238 = vpop.permute.xlu0 %1237
        %1239 = vrot.lane.b32.xlu0 %v1041, 48
        %v1240 = vpop.permute.xlu0 %1239
        %1241 = vrot.lane.b32.xlu0 %v1042, 48
        %v1242 = vpop.permute.xlu0 %1241
        %1259 = vrot.lane.b32.xlu0 %v1043, 56
        %v1260 = vpop.permute.xlu0 %1259
        %1261 = vrot.lane.b32.xlu0 %v1044, 56
        %v1262 = vpop.permute.xlu0 %1261
        %1263 = vrot.lane.b32.xlu0 %v1045, 56
        %v1264 = vpop.permute.xlu0 %1263
        %1265 = vrot.lane.b32.xlu0 %v1046, 56
        %v1266 = vpop.permute.xlu0 %1265
        %1267 = vrot.lane.b32.xlu0 %v1047, 56
        %v1268 = vpop.permute.xlu0 %1267
        %1269 = vrot.lane.b32.xlu0 %v1048, 56
        %v1270 = vpop.permute.xlu0 %1269
        %1271 = vrot.lane.b32.xlu0 %v1049, 56
        %v1272 = vpop.permute.xlu0 %1271
        %1273 = vrot.lane.b32.xlu0 %v1050, 56
        %v1274 = vpop.permute.xlu0 %1273
        %1291 = vrot.lane.b32.xlu0 %v1051, 64
        %v1292 = vpop.permute.xlu0 %1291
        %1293 = vrot.lane.b32.xlu0 %v1052, 64
        %v1294 = vpop.permute.xlu0 %1293
        %1295 = vrot.lane.b32.xlu0 %v1053, 64
        %v1296 = vpop.permute.xlu0 %1295
        %1297 = vrot.lane.b32.xlu0 %v1054, 64
        %v1298 = vpop.permute.xlu0 %1297
        %1299 = vrot.lane.b32.xlu0 %v1055, 64
        %v1300 = vpop.permute.xlu0 %1299
        %1301 = vrot.lane.b32.xlu0 %v1056, 64
        %v1302 = vpop.permute.xlu0 %1301
        %1303 = vrot.lane.b32.xlu0 %v1057, 64
        %v1304 = vpop.permute.xlu0 %1303
        %1305 = vrot.lane.b32.xlu0 %v1058, 64
        %v1306 = vpop.permute.xlu0 %1305
        %v1315 = vsel %vm733, %v986, %v1068
        %v1316 = vsel %vm733, %v987, %v1070
        %v1317 = vsel %vm733, %v988, %v1072
        %v1318 = vsel %vm733, %v989, %v1074
        %v1319 = vsel %vm733, %v990, %v1076
        %v1320 = vsel %vm733, %v991, %v1078
        %v1321 = vsel %vm733, %v992, %v1080
        %v1322 = vsel %vm733, %v993, %v1082
        %v1323 = vsel %vm751, %v1315, %v1100
        %v1324 = vsel %vm751, %v1316, %v1102
        %v1325 = vsel %vm751, %v1317, %v1104
        %v1326 = vsel %vm751, %v1318, %v1106
        %v1327 = vsel %vm751, %v1319, %v1108
        %v1328 = vsel %vm751, %v1320, %v1110
        %v1329 = vsel %vm751, %v1321, %v1112
        %v1330 = vsel %vm751, %v1322, %v1114
        %v1331 = vsel %vm769, %v1323, %v1132
        %v1332 = vsel %vm769, %v1324, %v1134
        %v1333 = vsel %vm769, %v1325, %v1136
        %v1334 = vsel %vm769, %v1326, %v1138
        %v1335 = vsel %vm769, %v1327, %v1140
        %v1336 = vsel %vm769, %v1328, %v1142
        %v1337 = vsel %vm769, %v1329, %v1144
        %v1338 = vsel %vm769, %v1330, %v1146
        %v1339 = vsel %vm787, %v1331, %v1164
        %v1340 = vsel %vm787, %v1332, %v1166
        %v1341 = vsel %vm787, %v1333, %v1168
        %v1342 = vsel %vm787, %v1334, %v1170
        %v1343 = vsel %vm787, %v1335, %v1172
        %v1344 = vsel %vm787, %v1336, %v1174
        %v1345 = vsel %vm787, %v1337, %v1176
        %v1346 = vsel %vm787, %v1338, %v1178
        %vm1347 = vcmask 326656
        %v1348 = vsel %vm1347, %v1339, %v1196
        %v1349 = vsel %vm1347, %v1340, %v1198
        %v1350 = vsel %vm1347, %v1341, %v1200
        %v1351 = vsel %vm1347, %v1342, %v1202
        %v1352 = vsel %vm1347, %v1343, %v1204
        %v1353 = vsel %vm1347, %v1344, %v1206
        %v1354 = vsel %vm1347, %v1345, %v1208
        %v1355 = vsel %vm1347, %v1346, %v1210
        %vm1356 = vcmask 392192
        %v1357 = vsel %vm1356, %v1348, %v1228
        %v1358 = vsel %vm1356, %v1349, %v1230
        %v1359 = vsel %vm1356, %v1350, %v1232
        %v1360 = vsel %vm1356, %v1351, %v1234
        %v1361 = vsel %vm1356, %v1352, %v1236
        %v1362 = vsel %vm1356, %v1353, %v1238
        %v1363 = vsel %vm1356, %v1354, %v1240
        %v1364 = vsel %vm1356, %v1355, %v1242
        %vm1365 = vcmask 457728
        %v1366 = vsel %vm1365, %v1357, %v1260
        %v1367 = vsel %vm1365, %v1358, %v1262
        %v1368 = vsel %vm1365, %v1359, %v1264
        %v1369 = vsel %vm1365, %v1360, %v1266
        %v1370 = vsel %vm1365, %v1361, %v1268
        %v1371 = vsel %vm1365, %v1362, %v1270
        %v1372 = vsel %vm1365, %v1363, %v1272
        %v1373 = vsel %vm1365, %v1364, %v1274
        %vm1374 = vcmask 523264
        %v1375 = vsel %vm1374, %v1366, %v1292
        %v1376 = vsel %vm1374, %v1367, %v1294
        %v1377 = vsel %vm1374, %v1368, %v1296
        %v1378 = vsel %vm1374, %v1369, %v1298
        %v1379 = vsel %vm1374, %v1370, %v1300
        %v1380 = vsel %vm1374, %v1371, %v1302
        %v1381 = vsel %vm1374, %v1372, %v1304
        %v1382 = vsel %vm1374, %v1373, %v1306
        %v1383 = vld [vmem:[#allocation10] sm:$0xff]
        %v1384 = vld [vmem:[#allocation12] sm:$0xff]
        %1386 = vset.pattern.permute.xlu0 0
        %1387 = vperm.xlu0 %1386, %v1384
        %v1388 = vpop.permute.xlu0 %1387
        %vm1390 = vcmask 588800
        %v1392 = vsel %vm1390, %v1383, 0
        %v1395 = vsel %vm1390, %v1375, 0
        %v1398 = vsel %vm1390, %v1376, 0
        %v1401 = vsel %vm1390, %v1377, 0
        %v1404 = vsel %vm1390, %v1378, 0
        %v1407 = vsel %vm1390, %v1379, 0
        %v1410 = vsel %vm1390, %v1380, 0
        %v1413 = vsel %vm1390, %v1381, 0
        %v1416 = vsel %vm1390, %v1382, 0
        %1418 = vmatprep.subr.mxu0 0.0
        %1419 = vmatpush1.xpose.msra.mxu0 %v1395
        %1420 = vmatprep.subr.mxu0 0.0
        %1421 = vmatpush1.xpose.msra.mxu0 %v1398
        %1422 = vmatprep.subr.mxu0 0.0
        %1423 = vmatpush1.xpose.msra.mxu0 %v1401
        %1424 = vmatprep.subr.mxu0 0.0
        %1425 = vmatpush1.xpose.msra.mxu0 %v1404
        %1426 = vmatprep.subr.mxu0 0.0
        %1427 = vmatpush1.xpose.msra.mxu0 %v1407
        %1428 = vmatprep.subr.mxu0 0.0
        %1429 = vmatpush1.xpose.msra.mxu0 %v1410
        %1430 = vmatprep.subr.mxu0 0.0
        %1431 = vmatpush1.xpose.msra.mxu0 %v1413
        %1432 = vmatprep.subr.mxu0 0.0
        %1433 = vmatpush1.xpose.msra.mxu0 %v1416
        %1434 = vmatprep.subr.mxu0 0.0
        %1435 = vmatpush1.xpose.msra.mxu0 0.0
        %1436 = vmatprep.subr.mxu0 0.0
        %1437 = vmatpush1.xpose.msra.mxu0 0.0
        %1438 = vmatprep.subr.mxu0 0.0
        %1439 = vmatpush1.xpose.msra.mxu0 0.0
        %1440 = vmatprep.subr.mxu0 0.0
        %1441 = vmatpush1.xpose.msra.mxu0 0.0
        %1442 = vmatprep.subr.mxu0 0.0
        %1443 = vmatpush1.xpose.msra.mxu0 0.0
        %1444 = vmatprep.subr.mxu0 0.0
        %1445 = vmatpush1.xpose.msra.mxu0 0.0
        %1446 = vmatprep.subr.mxu0 0.0
        %1447 = vmatpush1.xpose.msra.mxu0 0.0
        %1448 = vmatprep.subr.mxu0 0.0
        %1449 = vmatpush1.xpose.msra.mxu0 0.0
        %1450 = vmatprep.subr.mxu0 0.0
        %1451 = vmatpush1.xpose.msra.mxu0 0.0
        %1452 = vmatprep.subr.mxu0 0.0
        %1453 = vmatpush1.xpose.msra.mxu0 0.0
        %1454 = vmatprep.subr.mxu0 0.0
        %1455 = vmatpush1.xpose.msra.mxu0 0.0
        %1456 = vmatprep.subr.mxu0 0.0
        %1457 = vmatpush1.xpose.msra.mxu0 0.0
        %1458 = vmatprep.subr.mxu0 0.0
        %1459 = vmatpush1.xpose.msra.mxu0 0.0
        %1460 = vmatprep.subr.mxu0 0.0
        %1461 = vmatpush1.xpose.msra.mxu0 0.0
        %1462 = vmatprep.subr.mxu0 0.0
        %1463 = vmatpush1.xpose.msra.mxu0 0.0
        %1464 = vmatprep.subr.mxu0 0.0
        %1465 = vmatpush1.xpose.msra.mxu0 0.0
        %1466 = vmatprep.subr.mxu0 0.0
        %1467 = vmatpush1.xpose.msra.mxu0 0.0
        %1468 = vmatprep.subr.mxu0 0.0
        %1469 = vmatpush1.xpose.msra.mxu0 0.0
        %1470 = vmatprep.subr.mxu0 0.0
        %1471 = vmatpush1.xpose.msra.mxu0 0.0
        %1472 = vmatprep.subr.mxu0 0.0
        %1473 = vmatpush1.xpose.msra.mxu0 0.0
        %1474 = vmatprep.subr.mxu0 0.0
        %1475 = vmatpush1.xpose.msra.mxu0 0.0
        %1476 = vmatprep.subr.mxu0 0.0
        %1477 = vmatpush1.xpose.msra.mxu0 0.0
        %1478 = vmatprep.subr.mxu0 0.0
        %1479 = vmatpush1.xpose.msra.mxu0 0.0
        %1480 = vmatprep.subr.mxu0 0.0
        %1481 = vmatpush1.xpose.msra.mxu0 0.0
        %1482 = vmatprep.mubr.f32.mxu0 0.0
        %1483 = vmatmul.mubr.f32.gmra.mrb[0].mxu0 %v1392
        %v1484 = vpop.f32.mrb[0].mxu0
        %v1485 = vadd.f32 %v1388, %v1484
        %v1486 = vpop.f32.mrb[0].mxu0
        %1487 = vdwg.mxu0
        %v1488 = vmax.f32 %v1485, 0.0
        %1489 = vst.msk [vmem:[%s294] sm:$0xff] %vm1374, %v1488
        %s1490 = sand.u32 %s142, 1
        %s1491 = scalar_lea.sflag [#allocation6], %s1490
        %s1492 = sand.u32 %s142, 1
        %s1493 = smul.addr %s1492, 8
        %s1494 = scalar_lea.vmem [#allocation13], %s1493
        // Predicated region
        $region61: #{down_block_nhwc.1} parent=39 // pred_check
          %p1495 = pneg %p152
        $region62: #{down_block_nhwc.1} parent=39 // pred_check_branch
          %1497 = sbr.rel (%p1495) target = $region64
        $region63: #{down_block_nhwc.1} parent=39 // pred_region
          %s1499 = ssub.s32 128, 128
          %1500 = vsyncadd %s1491, %s1499
          %s1501 = smul.addr %s24, 128
          %s1502 = scalar_lea.hbm %s5, %s1501
          %s1504 = sshll.u32 %s1494, 4
          %s1505 = int_to_ptr.vmem [resolvable:$true] %s1504
          %1507 = dma.vmem_to_hbm [thread:$0]  %s1505, 128, %s1502, %s1491
        $region64: #{down_block_nhwc.1} parent=39 // pred_fallthru
          _
      $region40: #{down_block_nhwc.1} parent=5 // pred_fallthru
        _
      %p1508 = scmp.le.s32.totalorder 2, %s19
      // Predicated region
      $region65: #{down_block_nhwc.1} parent=5 // pred_check
        %p1509 = pneg %p1508
      $region66: #{down_block_nhwc.1} parent=5 // pred_check_branch
        %1511 = sbr.rel (%p1509) target = $region68
      $region67: #{down_block_nhwc.1} parent=5 // pred_region
        %s1512 = ssub.s32 %s19, 2
        // Predicated region
        $region69: #{down_block_nhwc.1} parent=67 // pred_check
          %p1513 = pneg %p158
        $region70: #{down_block_nhwc.1} parent=67 // pred_check_branch
          %1515 = sbr.rel (%p1513) target = $region72
        $region71: #{down_block_nhwc.1} parent=67 // pred_region
          %s1516 = sand.u32 %s143, 1
          %s1517 = scalar_lea.sflag [#allocation6], %s1516
          %s1518 = sand.u32 %s143, 1
          %s1519 = smul.addr %s1518, 8
          %s1520 = scalar_lea.vmem [#allocation13], %s1519
          %1521 = dma.done %s1517, 128
        $region72: #{down_block_nhwc.1} parent=67 // pred_fallthru
          _
      $region68: #{down_block_nhwc.1} parent=5 // pred_fallthru
        _
    $region6: #{down_block_nhwc.1} parent=1 // loop_footer
      %s23 = sadd.s32 1, %s19
    $region7: #{down_block_nhwc.1} parent=1 // loop_footer_branch
      %18 = sbr.rel target = $region3
    $region8: #{down_block_nhwc.1} parent=1 // loop_exit
      _
    %1522 = vsyncpa [#allocation5], 1
    %s1523 = scalar_lea.sflag [#allocation5], 1
    %1524 = vsyncpa %s1523, 1
    %1525 = vsyncpa [#allocation8], 1
    %1526 = vsyncpa [#allocation11], 1
    %1527 = vsyncpa [#allocation6], 1
    %s1528 = scalar_lea.sflag [#allocation6], 1
    %1529 = vsyncpa %s1528, 1

</llo_original>
